<compile_context>
chip_gen: v7x
topology: tpu7x:2x2x1
jax: 0.10.0
libtpu: 0.0.40
codegen_flags: <defaults>
</compile_context>

<pallas_src>
import functools

import jax
import jax.numpy as jnp
import numpy as np
from jax.experimental import pallas as pl
from jax.experimental.pallas import tpu as pltpu

_VMEM_LIMIT = 20 * 1024 * 1024          # largest layer needs ~10 MiB
_ACC_BUDGET = 256 * 1024                # f32 accumulator budget per row tile


def _pick_th(H, W, Cout, pool):
    """Largest row-tile TH in {8,4,2,1} dividing H whose accumulator fits."""
    valid = [t for t in (8, 4, 2, 1)
             if H % t == 0 and (not pool or t % 2 == 0)]
    assert valid, "no valid row-tile size"
    for t in valid:
        if t * (W + 2) * Cout * 4 <= _ACC_BUDGET:
            return t
    return valid[-1]


# ---------------------------------------------------------------------------
# 3x3 "same" conv (+ fused bias, optional ReLU, optional fused 2x2 maxpool)
# as shifted MXU matmuls over a flattened padded row strip.
# ---------------------------------------------------------------------------
def _conv3x3_kernel(x_ref, w_ref, b_ref, o_ref, xpad_ref, *,
                    W, Cout, TH, relu, pool, pack3):
    # x_ref:    (1, H, W, Cin)   full image, bf16 (resident across row tiles)
    # w_ref:    (9, Cin, Cout) bf16     or (3, 3*Cin, Cout) bf16 if pack3
    # b_ref:    (1, Cout)        f32
    # o_ref:    (1, TH, W, Cout) or (1, TH//2, W//2, Cout)
    # xpad_ref: ((TH+2)*(W+2)+8, Cin) bf16 scratch -- flattened padded strip
    Wp = W + 2
    M = TH * Wp
    t = pl.program_id(1)
    r0 = t * TH

    # ---- build the flattened zero-padded (TH+2, W+2, Cin) strip in VMEM ----
    xpad_ref[...] = jnp.zeros_like(xpad_ref)

    def copy_row(s, r):   # scratch row s <- image row r, at column offset 1
        xpad_ref[pl.ds(s * Wp + 1, W), :] = x_ref[0, r, :, :]

    @pl.when(t > 0)                        # top halo row (image row r0-1)
    def _():
        copy_row(0, r0 - 1)

    for s in range(1, TH + 1):             # interior rows: always valid
        copy_row(s, r0 + (s - 1))

    @pl.when(t < pl.num_programs(1) - 1)   # bottom halo row (image row r0+TH)
    def _():
        copy_row(TH + 1, r0 + TH)

    # ---- shifted MXU matmuls over the padded width --------------------------
    # Each tap is a contiguous (M, Cin) slice of the flat strip: no relayout
    # copies.  Columns W..W+1 of each output row are wrap garbage, discarded
    # in the epilogue.
    acc = jnp.zeros((M, Cout), jnp.float32)
    if pack3:
        # One MXU pass per kernel row: the three kx taps are packed along the
        # contraction dim -> 3 matmuls with K=3*Cin instead of 9 with K=Cin.
        for ky in range(3):
            o = ky * Wp
            patch = jnp.concatenate(
                [xpad_ref[pl.ds(o + kx, M), :] for kx in range(3)], axis=-1)
            acc = acc + jnp.dot(patch, w_ref[ky],
                                preferred_element_type=jnp.float32)
    else:
        for ky in range(3):
            for kx in range(3):
                patch = xpad_ref[pl.ds(ky * Wp + kx, M), :]      # (M, Cin)
                acc = acc + jnp.dot(patch, w_ref[ky * 3 + kx],
                                    preferred_element_type=jnp.float32)

    # ---- epilogue: bias, ReLU, drop wrap columns, optional 2x2 maxpool ------
    out = acc + b_ref[...]                                        # (M, Cout)
    if relu:
        out = jnp.maximum(out, 0.0)
    out = out.reshape(TH, Wp, Cout)[:, :W, :]                     # (TH, W, Cout)
    if pool:
        out = out.reshape(TH // 2, 2, W // 2, 2, Cout)
        out = out.max(axis=3).max(axis=1)                         # (TH/2, W/2, C)
    o_ref[0] = out.astype(o_ref.dtype)


def conv3x3(x, w9, b, *, relu, pool, out_dtype=jnp.bfloat16):
    """x: (N,H,W,Cin) bf16, w9: (9,Cin,Cout) bf16, b: (Cout,) f32."""
    N, H, W, Cin = x.shape
    Cout = w9.shape[-1]
    if pool:
        assert H % 2 == 0 and W % 2 == 0

    # Pad tiny channel counts (first layer, Cin=3) up to a multiple of 8.
    # Padded channels are zero in both x and w, so the conv result is exact.
    if Cin % 8 != 0:
        cpad = (-Cin) % 8
        x = jnp.pad(x, ((0, 0), (0, 0), (0, 0), (0, cpad)))
        w9 = jnp.pad(w9, ((0, 0), (0, cpad), (0, 0)))
        Cin += cpad

    pack3 = 3 * Cin <= 256                 # 3 taps fit one MXU contraction pass
    TH = _pick_th(H, W, Cout, pool)
    n_tiles = H // TH
    THo, Ho, Wo = (TH // 2, H // 2, W // 2) if pool else (TH, H, W)
    Mpad = (TH + 2) * (W + 2) + 8          # +8: taps may over-read wrap rows

    if pack3:
        # (9, Cin, Cout) -> (3, 3*Cin, Cout): [w(ky,0); w(ky,1); w(ky,2)]
        w_in = w9.reshape(3, 3 * Cin, Cout)
        w_spec = pl.BlockSpec((3, 3 * Cin, Cout), lambda n, t: (0, 0, 0))
    else:
        w_in = w9
        w_spec = pl.BlockSpec((9, Cin, Cout), lambda n, t: (0, 0, 0))

    kern = functools.partial(_conv3x3_kernel, W=W, Cout=Cout, TH=TH,
                             relu=relu, pool=pool, pack3=pack3)
    return pl.pallas_call(
        kern,
        out_shape=jax.ShapeDtypeStruct((N, Ho, Wo, Cout), out_dtype),
        grid=(N, n_tiles),
        in_specs=[
            # full image per batch element; block index constant over the
            # row-tile axis so it is DMA'd once per image, not per tile.
            pl.BlockSpec((1, H, W, Cin), lambda n, t: (n, 0, 0, 0)),
            w_spec,
            pl.BlockSpec((1, Cout), lambda n, t: (0, 0)),
        ],
        out_specs=pl.BlockSpec((1, THo, Wo, Cout), lambda n, t: (n, t, 0, 0)),
        scratch_shapes=[pltpu.VMEM((Mpad, Cin), jnp.bfloat16)],
        compiler_params=pltpu.CompilerParams(
            dimension_semantics=("parallel", "parallel"),
            vmem_limit_bytes=_VMEM_LIMIT),
    )(x, w_in, b.reshape(1, Cout))


# ---------------------------------------------------------------------------
# Parameters (deterministic xavier_uniform init, zero bias — as in the module)
# ---------------------------------------------------------------------------
_STAGES = (
    ((3, 64), (64, 64)),                        # features_1
    ((64, 128), (128, 128)),                    # features_2
    ((128, 256), (256, 256), (256, 256)),       # features_3
    ((256, 512), (512, 512), (512, 512)),       # features_4
    ((512, 512), (512, 512), (512, 512)),       # features_5
)
_POOL_AFTER = (True, True, True, False, False)


def _xavier_uniform(key, cin, cout):
    fan_in, fan_out = cin * 9, cout * 9
    limit = float(np.sqrt(6.0 / (fan_in + fan_out)))
    w = jax.random.uniform(key, (3, 3, cin, cout), jnp.float32, -limit, limit)
    return w.reshape(9, cin, cout).astype(jnp.bfloat16)


def init_params(key):
    params = {"stages": [], "cls": None}
    for stage in _STAGES:
        layers = []
        for cin, cout in stage:
            key, sub = jax.random.split(key)
            layers.append((_xavier_uniform(sub, cin, cout),
                           jnp.zeros((cout,), jnp.float32)))
        params["stages"].append(layers)
    key, sub = jax.random.split(key)
    params["cls"] = (_xavier_uniform(sub, 512, 512),
                     jnp.zeros((512,), jnp.float32))
    return params


# ---------------------------------------------------------------------------
# VGG.forward (use_decoder=False path)
# ---------------------------------------------------------------------------
def vgg_forward(x_nchw, params):
    x = jnp.transpose(x_nchw, (0, 2, 3, 1)).astype(jnp.bfloat16)   # NCHW->NHWC
    for si, layers in enumerate(params["stages"]):                  # features_1..5
        for li, (w, b) in enumerate(layers):
            is_last = li == len(layers) - 1
            # 2x2 maxpool of stages 1-3 is fused into the last conv's epilogue.
            x = conv3x3(x, w, b, relu=True,
                        pool=_POOL_AFTER[si] and is_last)
    w, b = params["cls"]                                             # self.cls
    out = conv3x3(x, w, b, relu=False, pool=False, out_dtype=jnp.float32)
    # TODO(synk): decoder branch (use_decoder=True: side3_1/side4_1/side5_1 +
    # channel concats) not implemented; the module defaults to
    # use_decoder=False, which is the path reproduced here.
    return jnp.transpose(out, (0, 3, 1, 2))                         # NHWC->NCHW


if __name__ == "__main__":
    key = jax.random.PRNGKey(0)
    kp, kx, kc1, kc2, kc3, kc4 = jax.random.split(key, 6)

    def conv_ref(x, w9, b, relu, pool):
        cin, cout = w9.shape[1], w9.shape[2]
        y = jax.lax.conv_general_dilated(
            x.astype(jnp.float32),
            w9.reshape(3, 3, cin, cout).astype(jnp.float32),
            window_strides=(1, 1), padding="SAME",
            dimension_numbers=("NHWC", "HWIO", "NHWC"))
        y = y + b
        if relu:
            y = jnp.maximum(y, 0.0)
        if pool:
            n, h, w_, c = y.shape
            y = y.reshape(n, h // 2, 2, w_ // 2, 2, c).max(axis=(2, 4))
        return y

    # --- sanity check 1: packed-tap path (Cin=32 -> pack3) vs XLA -----------
    xs = jax.random.normal(kc1, (1, 16, 16, 32), jnp.float32).astype(jnp.bfloat16)
    ws = _xavier_uniform(kc2, 32, 64)
    bs = jnp.linspace(-0.1, 0.1, 64, dtype=jnp.float32)
    for pool in (False, True):
        got = conv3x3(xs, ws, bs, relu=True, pool=pool, out_dtype=jnp.float32)
        ref = conv_ref(xs, ws, bs, True, pool)
        np.testing.assert_allclose(np.asarray(got), np.asarray(ref),
                                   rtol=2e-2, atol=2e-2)

    # --- sanity check 2: generic 9-tap path (Cin=128) vs XLA -----------------
    xg = jax.random.normal(kc3, (1, 8, 8, 128), jnp.float32).astype(jnp.bfloat16)
    wg = _xavier_uniform(kc4, 128, 128)
    bg = jnp.linspace(-0.05, 0.05, 128, dtype=jnp.float32)
    got = conv3x3(xg, wg, bg, relu=True, pool=False, out_dtype=jnp.float32)
    ref = conv_ref(xg, wg, bg, True, False)
    np.testing.assert_allclose(np.asarray(got), np.asarray(ref),
                               rtol=2e-2, atol=2e-2)

    # --- full VGG forward ----------------------------------------------------
    params = init_params(kp)
    x = jax.random.normal(kx, (2, 3, 32, 32), jnp.float32)   # NCHW, like PyTorch
    out = jax.jit(vgg_forward)(x, params)
    out = jax.block_until_ready(out)
    assert out.shape == (2, 512, 4, 4), out.shape
    assert out.dtype == jnp.float32
    print("KERNEL_OK")
</pallas_src>

<mosaic_0001>
module attributes {stable_mosaic.version = 11 : i64} {
  func.func @_conv3x3_kernel(%arg0: i32, %arg1: i32, %arg2: memref<1x16x16x32xbf16, #tpu.memory_space<vmem>>, %arg3: memref<3x96x64xbf16, #tpu.memory_space<vmem>>, %arg4: memref<1x64xf32, #tpu.memory_space<vmem>>, %arg5: memref<1x8x16x64xf32, #tpu.memory_space<vmem>>, %arg6: memref<188x32xbf16, #tpu.memory_space<vmem>>) attributes {dimension_semantics = [#tpu.dimension_semantics<parallel>, #tpu.dimension_semantics<parallel>], iteration_bounds = array<i64: 1, 2>, scalar_prefetch = 0 : i64, scratch_operands = 1 : i64, tpu.core_type = #tpu.core_type<tc>, window_params = [{transform_indices = @transform_0, window_bounds = array<i64: 1, 16, 16, 32>}, {pipeline_mode = #tpu.pipeline_mode<synchronous>, transform_indices = @transform_1, window_bounds = array<i64: 3, 96, 64>}, {pipeline_mode = #tpu.pipeline_mode<synchronous>, transform_indices = @transform_2, window_bounds = array<i64: 1, 64>}, {transform_indices = @transform_3, window_bounds = array<i64: 1, 8, 16, 64>}]} {
    %c8_i32 = arith.constant 8 : i32
    %0 = arith.muli %arg1, %c8_i32 : i32
    %cst = arith.constant 0.000000e+00 : bf16
    %1 = vector.broadcast %cst : bf16 to vector<188x32xbf16>
    %c0 = arith.constant 0 : index
    %c0_0 = arith.constant 0 : index
    %2 = vector.load %arg6[%c0, %c0_0] : memref<188x32xbf16, #tpu.memory_space<vmem>>, vector<188x32xbf16>
    tpu.vector_store %arg6[%c0, %c0_0], %1 {strides = array<i32>} : memref<188x32xbf16, #tpu.memory_space<vmem>>, vector<188x32xbf16>,
    %c0_i32 = arith.constant 0 : i32
    %3 = arith.cmpi sgt, %arg1, %c0_i32 : i32
    %4 = arith.extui %3 : i1 to i32
    %c0_i32_1 = arith.constant 0 : i32
    %5 = arith.cmpi ne, %4, %c0_i32_1 : i32
    scf.if %5 {
      %c1_i32_69 = arith.constant 1 : i32
      %84 = arith.subi %0, %c1_i32_69 : i32
      %c0_70 = arith.constant 0 : index
      %85 = arith.index_cast %84 : i32 to index
      %c0_71 = arith.constant 0 : index
      %c0_72 = arith.constant 0 : index
      %86 = vector.load %arg2[%c0_70, %85, %c0_71, %c0_72] : memref<1x16x16x32xbf16, #tpu.memory_space<vmem>>, vector<1x1x16x32xbf16>
      %87 = vector.shape_cast %86 : vector<1x1x16x32xbf16> to vector<16x32xbf16>
      %c1_73 = arith.constant 1 : index
      %c0_74 = arith.constant 0 : index
      %88 = vector.load %arg6[%c1_73, %c0_74] : memref<188x32xbf16, #tpu.memory_space<vmem>>, vector<16x32xbf16>
      tpu.vector_store %arg6[%c1_73, %c0_74], %87 {strides = array<i32>} : memref<188x32xbf16, #tpu.memory_space<vmem>>, vector<16x32xbf16>,
    } else {
    }
    %c0_i32_2 = arith.constant 0 : i32
    %6 = arith.addi %0, %c0_i32_2 : i32
    %c0_3 = arith.constant 0 : index
    %7 = arith.index_cast %6 : i32 to index
    %c0_4 = arith.constant 0 : index
    %c0_5 = arith.constant 0 : index
    %8 = vector.load %arg2[%c0_3, %7, %c0_4, %c0_5] : memref<1x16x16x32xbf16, #tpu.memory_space<vmem>>, vector<1x1x16x32xbf16>
    %9 = vector.shape_cast %8 : vector<1x1x16x32xbf16> to vector<16x32xbf16>
    %c19 = arith.constant 19 : index
    %c0_6 = arith.constant 0 : index
    %10 = vector.load %arg6[%c19, %c0_6] : memref<188x32xbf16, #tpu.memory_space<vmem>>, vector<16x32xbf16>
    tpu.vector_store %arg6[%c19, %c0_6], %9 {strides = array<i32>} : memref<188x32xbf16, #tpu.memory_space<vmem>>, vector<16x32xbf16>,
    %c1_i32 = arith.constant 1 : i32
    %11 = arith.addi %0, %c1_i32 : i32
    %c0_7 = arith.constant 0 : index
    %12 = arith.index_cast %11 : i32 to index
    %c0_8 = arith.constant 0 : index
    %c0_9 = arith.constant 0 : index
    %13 = vector.load %arg2[%c0_7, %12, %c0_8, %c0_9] : memref<1x16x16x32xbf16, #tpu.memory_space<vmem>>, vector<1x1x16x32xbf16>
    %14 = vector.shape_cast %13 : vector<1x1x16x32xbf16> to vector<16x32xbf16>
    %c37 = arith.constant 37 : index
    %c0_10 = arith.constant 0 : index
    %15 = vector.load %arg6[%c37, %c0_10] : memref<188x32xbf16, #tpu.memory_space<vmem>>, vector<16x32xbf16>
    tpu.vector_store %arg6[%c37, %c0_10], %14 {strides = array<i32>} : memref<188x32xbf16, #tpu.memory_space<vmem>>, vector<16x32xbf16>,
    %c2_i32 = arith.constant 2 : i32
    %16 = arith.addi %0, %c2_i32 : i32
    %c0_11 = arith.constant 0 : index
    %17 = arith.index_cast %16 : i32 to index
    %c0_12 = arith.constant 0 : index
    %c0_13 = arith.constant 0 : index
    %18 = vector.load %arg2[%c0_11, %17, %c0_12, %c0_13] : memref<1x16x16x32xbf16, #tpu.memory_space<vmem>>, vector<1x1x16x32xbf16>
    %19 = vector.shape_cast %18 : vector<1x1x16x32xbf16> to vector<16x32xbf16>
    %c55 = arith.constant 55 : index
    %c0_14 = arith.constant 0 : index
    %20 = vector.load %arg6[%c55, %c0_14] : memref<188x32xbf16, #tpu.memory_space<vmem>>, vector<16x32xbf16>
    tpu.vector_store %arg6[%c55, %c0_14], %19 {strides = array<i32>} : memref<188x32xbf16, #tpu.memory_space<vmem>>, vector<16x32xbf16>,
    %c3_i32 = arith.constant 3 : i32
    %21 = arith.addi %0, %c3_i32 : i32
    %c0_15 = arith.constant 0 : index
    %22 = arith.index_cast %21 : i32 to index
    %c0_16 = arith.constant 0 : index
    %c0_17 = arith.constant 0 : index
    %23 = vector.load %arg2[%c0_15, %22, %c0_16, %c0_17] : memref<1x16x16x32xbf16, #tpu.memory_space<vmem>>, vector<1x1x16x32xbf16>
    %24 = vector.shape_cast %23 : vector<1x1x16x32xbf16> to vector<16x32xbf16>
    %c73 = arith.constant 73 : index
    %c0_18 = arith.constant 0 : index
    %25 = vector.load %arg6[%c73, %c0_18] : memref<188x32xbf16, #tpu.memory_space<vmem>>, vector<16x32xbf16>
    tpu.vector_store %arg6[%c73, %c0_18], %24 {strides = array<i32>} : memref<188x32xbf16, #tpu.memory_space<vmem>>, vector<16x32xbf16>,
    %c4_i32 = arith.constant 4 : i32
    %26 = arith.addi %0, %c4_i32 : i32
    %c0_19 = arith.constant 0 : index
    %27 = arith.index_cast %26 : i32 to index
    %c0_20 = arith.constant 0 : index
    %c0_21 = arith.constant 0 : index
    %28 = vector.load %arg2[%c0_19, %27, %c0_20, %c0_21] : memref<1x16x16x32xbf16, #tpu.memory_space<vmem>>, vector<1x1x16x32xbf16>
    %29 = vector.shape_cast %28 : vector<1x1x16x32xbf16> to vector<16x32xbf16>
    %c91 = arith.constant 91 : index
    %c0_22 = arith.constant 0 : index
    %30 = vector.load %arg6[%c91, %c0_22] : memref<188x32xbf16, #tpu.memory_space<vmem>>, vector<16x32xbf16>
    tpu.vector_store %arg6[%c91, %c0_22], %29 {strides = array<i32>} : memref<188x32xbf16, #tpu.memory_space<vmem>>, vector<16x32xbf16>,
    %c5_i32 = arith.constant 5 : i32
    %31 = arith.addi %0, %c5_i32 : i32
    %c0_23 = arith.constant 0 : index
    %32 = arith.index_cast %31 : i32 to index
    %c0_24 = arith.constant 0 : index
    %c0_25 = arith.constant 0 : index
    %33 = vector.load %arg2[%c0_23, %32, %c0_24, %c0_25] : memref<1x16x16x32xbf16, #tpu.memory_space<vmem>>, vector<1x1x16x32xbf16>
    %34 = vector.shape_cast %33 : vector<1x1x16x32xbf16> to vector<16x32xbf16>
    %c109 = arith.constant 109 : index
    %c0_26 = arith.constant 0 : index
    %35 = vector.load %arg6[%c109, %c0_26] : memref<188x32xbf16, #tpu.memory_space<vmem>>, vector<16x32xbf16>
    tpu.vector_store %arg6[%c109, %c0_26], %34 {strides = array<i32>} : memref<188x32xbf16, #tpu.memory_space<vmem>>, vector<16x32xbf16>,
    %c6_i32 = arith.constant 6 : i32
    %36 = arith.addi %0, %c6_i32 : i32
    %c0_27 = arith.constant 0 : index
    %37 = arith.index_cast %36 : i32 to index
    %c0_28 = arith.constant 0 : index
    %c0_29 = arith.constant 0 : index
    %38 = vector.load %arg2[%c0_27, %37, %c0_28, %c0_29] : memref<1x16x16x32xbf16, #tpu.memory_space<vmem>>, vector<1x1x16x32xbf16>
    %39 = vector.shape_cast %38 : vector<1x1x16x32xbf16> to vector<16x32xbf16>
    %c127 = arith.constant 127 : index
    %c0_30 = arith.constant 0 : index
    %40 = vector.load %arg6[%c127, %c0_30] : memref<188x32xbf16, #tpu.memory_space<vmem>>, vector<16x32xbf16>
    tpu.vector_store %arg6[%c127, %c0_30], %39 {strides = array<i32>} : memref<188x32xbf16, #tpu.memory_space<vmem>>, vector<16x32xbf16>,
    %c7_i32 = arith.constant 7 : i32
    %41 = arith.addi %0, %c7_i32 : i32
    %c0_31 = arith.constant 0 : index
    %42 = arith.index_cast %41 : i32 to index
    %c0_32 = arith.constant 0 : index
    %c0_33 = arith.constant 0 : index
    %43 = vector.load %arg2[%c0_31, %42, %c0_32, %c0_33] : memref<1x16x16x32xbf16, #tpu.memory_space<vmem>>, vector<1x1x16x32xbf16>
    %44 = vector.shape_cast %43 : vector<1x1x16x32xbf16> to vector<16x32xbf16>
    %c145 = arith.constant 145 : index
    %c0_34 = arith.constant 0 : index
    %45 = vector.load %arg6[%c145, %c0_34] : memref<188x32xbf16, #tpu.memory_space<vmem>>, vector<16x32xbf16>
    tpu.vector_store %arg6[%c145, %c0_34], %44 {strides = array<i32>} : memref<188x32xbf16, #tpu.memory_space<vmem>>, vector<16x32xbf16>,
    %c1_i32_35 = arith.constant 1 : i32
    %46 = arith.cmpi slt, %arg1, %c1_i32_35 : i32
    %47 = arith.extui %46 : i1 to i32
    %c0_i32_36 = arith.constant 0 : i32
    %48 = arith.cmpi ne, %47, %c0_i32_36 : i32
    scf.if %48 {
      %c8_i32_69 = arith.constant 8 : i32
      %84 = arith.addi %0, %c8_i32_69 : i32
      %c0_70 = arith.constant 0 : index
      %85 = arith.index_cast %84 : i32 to index
      %c0_71 = arith.constant 0 : index
      %c0_72 = arith.constant 0 : index
      %86 = vector.load %arg2[%c0_70, %85, %c0_71, %c0_72] : memref<1x16x16x32xbf16, #tpu.memory_space<vmem>>, vector<1x1x16x32xbf16>
      %87 = vector.shape_cast %86 : vector<1x1x16x32xbf16> to vector<16x32xbf16>
      %c163 = arith.constant 163 : index
      %c0_73 = arith.constant 0 : index
      %88 = vector.load %arg6[%c163, %c0_73] : memref<188x32xbf16, #tpu.memory_space<vmem>>, vector<16x32xbf16>
      tpu.vector_store %arg6[%c163, %c0_73], %87 {strides = array<i32>} : memref<188x32xbf16, #tpu.memory_space<vmem>>, vector<16x32xbf16>,
    } else {
    }
    %cst_37 = arith.constant 0.000000e+00 : f32
    %49 = vector.broadcast %cst_37 : f32 to vector<144x64xf32>
    %c0_38 = arith.constant 0 : index
    %c0_39 = arith.constant 0 : index
    %50 = vector.load %arg6[%c0_38, %c0_39] : memref<188x32xbf16, #tpu.memory_space<vmem>>, vector<144x32xbf16>
    %c1 = arith.constant 1 : index
    %c0_40 = arith.constant 0 : index
    %51 = vector.load %arg6[%c1, %c0_40] : memref<188x32xbf16, #tpu.memory_space<vmem>>, vector<144x32xbf16>
    %c2 = arith.constant 2 : index
    %c0_41 = arith.constant 0 : index
    %52 = vector.load %arg6[%c2, %c0_41] : memref<188x32xbf16, #tpu.memory_space<vmem>>, vector<144x32xbf16>
    %53 = tpu.concatenate %50, %51, %52 in 1 : vector<144x32xbf16>, vector<144x32xbf16>, vector<144x32xbf16> -> vector<144x96xbf16>
    %c0_42 = arith.constant 0 : index
    %c0_43 = arith.constant 0 : index
    %c0_44 = arith.constant 0 : index
    %54 = vector.load %arg3[%c0_42, %c0_43, %c0_44] : memref<3x96x64xbf16, #tpu.memory_space<vmem>>, vector<1x96x64xbf16>
    %55 = vector.shape_cast %54 : vector<1x96x64xbf16> to vector<96x64xbf16>
    %cst_45 = arith.constant dense<0.000000e+00> : vector<144x64xf32>
    %56 = tpu.matmul %53, %55, %cst_45 {dimension_numbers = #tpu.dot_dimension_numbers<[1], [0], [0], [1], [0, 0, 1, 1], [], []>} : vector<144x96xbf16>, vector<96x64xbf16>, vector<144x64xf32> -> vector<144x64xf32>
    %57 = arith.addf %49, %56 : vector<144x64xf32>
    %c18 = arith.constant 18 : index
    %c0_46 = arith.constant 0 : index
    %58 = vector.load %arg6[%c18, %c0_46] : memref<188x32xbf16, #tpu.memory_space<vmem>>, vector<144x32xbf16>
    %c19_47 = arith.constant 19 : index
    %c0_48 = arith.constant 0 : index
    %59 = vector.load %arg6[%c19_47, %c0_48] : memref<188x32xbf16, #tpu.memory_space<vmem>>, vector<144x32xbf16>
    %c20 = arith.constant 20 : index
    %c0_49 = arith.constant 0 : index
    %60 = vector.load %arg6[%c20, %c0_49] : memref<188x32xbf16, #tpu.memory_space<vmem>>, vector<144x32xbf16>
    %61 = tpu.concatenate %58, %59, %60 in 1 : vector<144x32xbf16>, vector<144x32xbf16>, vector<144x32xbf16> -> vector<144x96xbf16>
    %c1_50 = arith.constant 1 : index
    %c0_51 = arith.constant 0 : index
    %c0_52 = arith.constant 0 : index
    %62 = vector.load %arg3[%c1_50, %c0_51, %c0_52] : memref<3x96x64xbf16, #tpu.memory_space<vmem>>, vector<1x96x64xbf16>
    %63 = vector.shape_cast %62 : vector<1x96x64xbf16> to vector<96x64xbf16>
    %cst_53 = arith.constant dense<0.000000e+00> : vector<144x64xf32>
    %64 = tpu.matmul %61, %63, %cst_53 {dimension_numbers = #tpu.dot_dimension_numbers<[1], [0], [0], [1], [0, 0, 1, 1], [], []>} : vector<144x96xbf16>, vector<96x64xbf16>, vector<144x64xf32> -> vector<144x64xf32>
    %65 = arith.addf %57, %64 : vector<144x64xf32>
    %c36 = arith.constant 36 : index
    %c0_54 = arith.constant 0 : index
    %66 = vector.load %arg6[%c36, %c0_54] : memref<188x32xbf16, #tpu.memory_space<vmem>>, vector<144x32xbf16>
    %c37_55 = arith.constant 37 : index
    %c0_56 = arith.constant 0 : index
    %67 = vector.load %arg6[%c37_55, %c0_56] : memref<188x32xbf16, #tpu.memory_space<vmem>>, vector<144x32xbf16>
    %c38 = arith.constant 38 : index
    %c0_57 = arith.constant 0 : index
    %68 = vector.load %arg6[%c38, %c0_57] : memref<188x32xbf16, #tpu.memory_space<vmem>>, vector<144x32xbf16>
    %69 = tpu.concatenate %66, %67, %68 in 1 : vector<144x32xbf16>, vector<144x32xbf16>, vector<144x32xbf16> -> vector<144x96xbf16>
    %c2_58 = arith.constant 2 : index
    %c0_59 = arith.constant 0 : index
    %c0_60 = arith.constant 0 : index
    %70 = vector.load %arg3[%c2_58, %c0_59, %c0_60] : memref<3x96x64xbf16, #tpu.memory_space<vmem>>, vector<1x96x64xbf16>
    %71 = vector.shape_cast %70 : vector<1x96x64xbf16> to vector<96x64xbf16>
    %cst_61 = arith.constant dense<0.000000e+00> : vector<144x64xf32>
    %72 = tpu.matmul %69, %71, %cst_61 {dimension_numbers = #tpu.dot_dimension_numbers<[1], [0], [0], [1], [0, 0, 1, 1], [], []>} : vector<144x96xbf16>, vector<96x64xbf16>, vector<144x64xf32> -> vector<144x64xf32>
    %73 = arith.addf %65, %72 : vector<144x64xf32>
    %c0_62 = arith.constant 0 : index
    %c0_63 = arith.constant 0 : index
    %74 = vector.load %arg4[%c0_62, %c0_63] : memref<1x64xf32, #tpu.memory_space<vmem>>, vector<1x64xf32>
    %75 = vector.broadcast %74 : vector<1x64xf32> to vector<144x64xf32>
    %76 = arith.addf %73, %75 : vector<144x64xf32>
    %cst_64 = arith.constant 0.000000e+00 : f32
    %77 = vector.broadcast %cst_64 : f32 to vector<144x64xf32>
    %78 = arith.maximumf %76, %77 : vector<144x64xf32>
    %79 = vector.shape_cast %78 : vector<144x64xf32> to vector<8x18x64xf32>
    %80 = vector.extract_strided_slice %79 {offsets = [0, 0, 0], sizes = [8, 16, 64], strides = [1, 1, 1]} : vector<8x18x64xf32> to vector<8x16x64xf32>
    %c0_65 = arith.constant 0 : index
    %c0_66 = arith.constant 0 : index
    %c0_67 = arith.constant 0 : index
    %c0_68 = arith.constant 0 : index
    %81 = vector.load %arg5[%c0_65, %c0_66, %c0_67, %c0_68] : memref<1x8x16x64xf32, #tpu.memory_space<vmem>>, vector<1x8x16x64xf32>
    %82 = vector.shape_cast %81 : vector<1x8x16x64xf32> to vector<8x16x64xf32>
    %83 = vector.shape_cast %80 : vector<8x16x64xf32> to vector<1x8x16x64xf32>
    tpu.vector_store %arg5[%c0_65, %c0_66, %c0_67, %c0_68], %83 {strides = array<i32>} : memref<1x8x16x64xf32, #tpu.memory_space<vmem>>, vector<1x8x16x64xf32>,
    return
  }
  func.func @transform_0(%arg0: i32, %arg1: i32) -> (i32, i32, i32, i32) {
    %c0_i32 = arith.constant 0 : i32
    %c0_i32_0 = arith.constant 0 : i32
    %c0_i32_1 = arith.constant 0 : i32
    %c0_i32_2 = arith.constant 0 : i32
    return %arg0, %c0_i32, %c0_i32_0, %c0_i32_1 : i32, i32, i32, i32
  }
  func.func @transform_1(%arg0: i32, %arg1: i32) -> (i32, i32, i32) {
    %c0_i32 = arith.constant 0 : i32
    %c0_i32_0 = arith.constant 0 : i32
    %c0_i32_1 = arith.constant 0 : i32
    %c0_i32_2 = arith.constant 0 : i32
    return %c0_i32, %c0_i32_0, %c0_i32_1 : i32, i32, i32
  }
  func.func @transform_2(%arg0: i32, %arg1: i32) -> (i32, i32) {
    %c0_i32 = arith.constant 0 : i32
    %c0_i32_0 = arith.constant 0 : i32
    %c0_i32_1 = arith.constant 0 : i32
    return %c0_i32, %c0_i32_0 : i32, i32
  }
  func.func @transform_3(%arg0: i32, %arg1: i32) -> (i32, i32, i32, i32) {
    %c0_i32 = arith.constant 0 : i32
    %c0_i32_0 = arith.constant 0 : i32
    %c0_i32_1 = arith.constant 0 : i32
    return %arg0, %arg1, %c0_i32, %c0_i32_0 : i32, i32, i32, i32
  }
}

</mosaic_0001>

<llo_original>
// kernel: tpu_custom_call.1
$region0: #{tpu_custom_call.1}
  #allocation0 [shape = 'u32[]', space=smem, size = 0x4, offset = 0x4, fixed_abs, tag = 'smem constant byte address 0x4 - core index']
  #allocation1 [shape = 'u32[144,128]{1,0:T(1,128)}', space=vmem, size = 0x12000, scoped, tag = 'internal scratch']
  #allocation2 [shape = 'bf16[188,32]{1,0:T(8,128)(2,1)}', space=vmem, size = 0xc000, scoped, tag = 'scratch operand']
  %s0 = inlined_call_operand.vmem [shape: bf16[1,16,16,32], index: 0, kind: input, shape index: {}]
  %s1 = inlined_call_operand.vmem [shape: bf16[3,96,64], index: 1, kind: input, shape index: {}]
  %s2 = inlined_call_operand.vmem [shape: f32[1,64], index: 2, kind: input, shape index: {}]
  %s3 = inlined_call_operand.hbm [shape: f32[1,16,16,64], index: 3, kind: output, shape index: {}]
  %s4 = sld [smem:[#allocation0]]
  $region53: #{tpu_custom_call.1} parent=0
    _
  %s6 = ssub.s32 1, %s4
  %s7 = scalar_select 0, %s6, %s4
  $region1: #{tpu_custom_call.1} parent=0
    #allocation3 [shape = 'u8[131072]{0}', space=vmem, size = 0x20000, scoped, tag = 'output window, operand 0']
    #allocation4 [shape = 's32[2]{0}', space=sflag, size = 0x8, scoped, tag = 'scoped memory for tpu_custom_call.1']
    %8 = vsyncpa [#allocation4], 0
    %s9 = scalar_lea.sflag [#allocation4], 1
    %10 = vsyncpa %s9, 0
    loop: start=0, step=1, limit=4
    $region2: #{tpu_custom_call.1} parent=1 // loop_pre_header
      _
    $region3: #{tpu_custom_call.1} parent=1 // loop_header
      %s12 = sphi 0, %s16
      %p13 = scmp.ge.s32.totalorder %s12, 4
      %s19 = sphi 0, %s31
      %s20 = sphi 0, %s27
      %s21 = sphi 0, %s19
      %s22 = sphi 0, %s20
      %s23 = sphi 0, %s21
      %s24 = sphi 0, %s22
      %s34 = sphi 0, %s36
      %s37 = sphi 0, %s34
      %s38 = sphi 0, %s37
      %s54 = sphi 0, %s38
      %s58 = sphi 0, %s58
      %s60 = sphi 0, %s58
      %s61 = sphi 0, %s60
      %s75 = sphi 0, %s61
      %s79 = sphi 0, %s79
      %s81 = sphi 0, %s79
      %s82 = sphi 0, %s81
      %s96 = sphi 0, %s82
      %s104 = sphi 0, %s106
      %s107 = sphi 0, %s104
      %s108 = sphi 0, %s107
      %s124 = sphi 0, %s108
    $region4: #{tpu_custom_call.1} parent=1 // loop_header_branch
      %15 = sbr.rel (%p13) target = $region8
    $region5: #{tpu_custom_call.1} parent=1 // loop_body
      %s17 = ssub.s32 %s12, 1
      %s18 = ssub.s32 %s12, 2
      %s25 = sadd.s32 1, %s20
      %p26 = scmp.ge.s32.totalorder %s25, 2
      %s27 = scalar_select %p26, 0, %s25
      %s28 = sadd.s32 1, %s19
      %s29 = scalar_select %p26, %s28, %s19
      %p30 = scmp.ge.s32.totalorder %s29, 1
      %s31 = scalar_select %p30, 0, %s29
      %s32 = ssub.s32 %s19, %s31
      %p33 = scmp.eq.s32.totalorder %s32, 0
      %s35 = sadd.s32 %s34, 1
      %s36 = scalar_select %p33, %s34, %s35
      %p39 = pneg %p33
      %p40 = scmp.eq.s32.totalorder %s12, 1
      %p41 = por %p39, %p40
      %p42 = scmp.ne.s32.totalorder %s34, %s37
      %p43 = scmp.eq.s32.totalorder %s12, 0
      %p44 = por %p42, %p43
      %p45 = scmp.ne.s32.totalorder %s34, %s37
      %p46 = scmp.eq.s32.totalorder %s17, 1
      %p47 = por %p45, %p46
      %p48 = scmp.ne.s32.totalorder %s37, %s38
      %p49 = scmp.eq.s32.totalorder %s17, 0
      %p50 = por %p48, %p49
      %p51 = scmp.ne.s32.totalorder %s37, %s38
      %p52 = scmp.eq.s32.totalorder %s18, 1
      %p53 = por %p51, %p52
      %p55 = scmp.ne.s32.totalorder %s38, %s54
      %p56 = scmp.eq.s32.totalorder %s18, 0
      %p57 = por %p55, %p56
      %s59 = sadd.s32 %s58, 1
      %p62 = scmp.eq.s32.totalorder %s12, 1
      %p63 = scmp.ne.s32.totalorder %s58, %s60
      %p64 = scmp.eq.s32.totalorder %s12, 0
      %p65 = por %p63, %p64
      %p66 = scmp.ne.s32.totalorder %s58, %s60
      %p67 = scmp.eq.s32.totalorder %s17, 1
      %p68 = por %p66, %p67
      %p69 = scmp.ne.s32.totalorder %s60, %s61
      %p70 = scmp.eq.s32.totalorder %s17, 0
      %p71 = por %p69, %p70
      %p72 = scmp.ne.s32.totalorder %s60, %s61
      %p73 = scmp.eq.s32.totalorder %s18, 1
      %p74 = por %p72, %p73
      %p76 = scmp.ne.s32.totalorder %s61, %s75
      %p77 = scmp.eq.s32.totalorder %s18, 0
      %p78 = por %p76, %p77
      %s80 = sadd.s32 %s79, 1
      %p83 = scmp.eq.s32.totalorder %s12, 1
      %p84 = scmp.ne.s32.totalorder %s79, %s81
      %p85 = scmp.eq.s32.totalorder %s12, 0
      %p86 = por %p84, %p85
      %p87 = scmp.ne.s32.totalorder %s79, %s81
      %p88 = scmp.eq.s32.totalorder %s17, 1
      %p89 = por %p87, %p88
      %p90 = scmp.ne.s32.totalorder %s81, %s82
      %p91 = scmp.eq.s32.totalorder %s17, 0
      %p92 = por %p90, %p91
      %p93 = scmp.ne.s32.totalorder %s81, %s82
      %p94 = scmp.eq.s32.totalorder %s18, 1
      %p95 = por %p93, %p94
      %p97 = scmp.ne.s32.totalorder %s82, %s96
      %p98 = scmp.eq.s32.totalorder %s18, 0
      %p99 = por %p97, %p98
      %s100 = ssub.s32 %s19, %s31
      %s101 = ssub.s32 %s20, %s27
      %s102 = sor.u32 %s100, %s101
      %p103 = scmp.eq.s32.totalorder %s102, 0
      %s105 = sadd.s32 %s104, 1
      %s106 = scalar_select %p103, %s104, %s105
      %p109 = pneg %p103
      %p110 = scmp.eq.s32.totalorder %s12, 1
      %p111 = por %p109, %p110
      %p112 = scmp.ne.s32.totalorder %s104, %s107
      %p113 = scmp.eq.s32.totalorder %s12, 0
      %p114 = por %p112, %p113
      %p115 = scmp.ne.s32.totalorder %s104, %s107
      %p116 = scmp.eq.s32.totalorder %s17, 1
      %p117 = por %p115, %p116
      %p118 = scmp.ne.s32.totalorder %s107, %s108
      %p119 = scmp.eq.s32.totalorder %s17, 0
      %p120 = por %p118, %p119
      %p121 = scmp.ne.s32.totalorder %s107, %s108
      %p122 = scmp.eq.s32.totalorder %s18, 1
      %p123 = por %p121, %p122
      %p125 = scmp.ne.s32.totalorder %s108, %s124
      %p126 = scmp.eq.s32.totalorder %s18, 0
      %p127 = por %p125, %p126
      %p128 = scmp.le.s32.totalorder 1, %s12
      %p129 = scmp.lt.s32.totalorder %s12, 3
      %p130 = pnand %p128, %p129
      %p131 = pneg %p130
      // Predicated region
      $region9: #{tpu_custom_call.1} parent=5 // pred_check
        _
      $region10: #{tpu_custom_call.1} parent=5 // pred_check_branch
        %133 = sbr.rel (%p130) target = $region12
      $region11: #{tpu_custom_call.1} parent=5 // pred_region
        %s134 = ssub.s32 %s12, 1
        // Predicated region
        $region13: #{tpu_custom_call.1} parent=11 // pred_check
          %p135 = pneg %p50
        $region14: #{tpu_custom_call.1} parent=11 // pred_check_branch
          %137 = sbr.rel (%p135) target = $region16
        $region15: #{tpu_custom_call.1} parent=11 // pred_region
          %p138 = scmp.lt.s32.totalorder %s21, 0
          %s139 = scalar_select %p138, %s21, 0
          %s140 = smul.addr %s139, 32
          %s141 = smul.addr %s140, 4
          %s142 = scalar_lea.vmem %s0, %s141
        $region16: #{tpu_custom_call.1} parent=11 // pred_fallthru
          _
        // Predicated region
        $region17: #{tpu_custom_call.1} parent=11 // pred_check
          %p143 = pneg %p71
        $region18: #{tpu_custom_call.1} parent=11 // pred_check_branch
          %145 = sbr.rel (%p143) target = $region20
        $region19: #{tpu_custom_call.1} parent=11 // pred_region
          _
        $region20: #{tpu_custom_call.1} parent=11 // pred_fallthru
          _
        // Predicated region
        $region21: #{tpu_custom_call.1} parent=11 // pred_check
          %p146 = pneg %p92
        $region22: #{tpu_custom_call.1} parent=11 // pred_check_branch
          %148 = sbr.rel (%p146) target = $region24
        $region23: #{tpu_custom_call.1} parent=11 // pred_region
          _
        $region24: #{tpu_custom_call.1} parent=11 // pred_fallthru
          _
      $region12: #{tpu_custom_call.1} parent=5 // pred_fallthru
        _
      %p149 = scmp.lt.s32.totalorder %s12, 2
      // Predicated region
      $region25: #{tpu_custom_call.1} parent=5 // pred_check
        %p150 = pneg %p149
      $region26: #{tpu_custom_call.1} parent=5 // pred_check_branch
        %152 = sbr.rel (%p150) target = $region28
      $region27: #{tpu_custom_call.1} parent=5 // pred_region
        _
      $region28: #{tpu_custom_call.1} parent=5 // pred_fallthru
        _
      %p153 = scmp.le.s32.totalorder 1, %s12
      %p154 = scmp.lt.s32.totalorder %s12, 3
      %p155 = pnand %p153, %p154
      %p156 = pneg %p155
      // Predicated region
      $region29: #{tpu_custom_call.1} parent=5 // pred_check
        _
      $region30: #{tpu_custom_call.1} parent=5 // pred_check_branch
        %158 = sbr.rel (%p155) target = $region32
      $region31: #{tpu_custom_call.1} parent=5 // pred_region
        %s159 = ssub.s32 %s12, 1
        %p160 = scmp.lt.s32.totalorder %s21, 0
        %s161 = scalar_select %p160, %s21, 0
        %s162 = smul.addr %s161, 32
        %s163 = smul.addr %s162, 4
        %s164 = scalar_lea.vmem %s0, %s163
        %p165 = pneg %p50
        %p166 = pneg %p47
        %p167 = pneg %p71
        %p168 = pneg %p68
        %p169 = pneg %p92
        %p170 = pneg %p89
        %p171 = pneg %p120
        %p172 = pneg %p117
        %s173 = sand.u32 %s107, 1
        %s174 = scalar_lea.sflag [#allocation4], %s173
        %s175 = sand.u32 %s107, 1
        %s176 = smul.addr %s175, 128
        %s177 = scalar_lea.vmem [#allocation3], %s176
        %p178 = scmp.lt.s32.totalorder %s21, 0
        %s179 = scalar_select %p178, %s21, 0
        %s180 = smul.addr %s179, 32
        %s181 = smul.addr %s180, 4
        %s182 = scalar_lea.vmem %s0, %s181
        %s183 = smul.u32 8, %s22
        %s185 = smul.u32 %s22, 8
        %vm186 = vcmask 257024
        %187 = vst.msk [vmem:[#allocation2] sm:$0xf] %vm186, 0
        %188 = vst.msk [vmem:[#allocation2 + $0x4] sm:$0xf] %vm186, 0
        %189 = vst.msk [vmem:[#allocation2 + $0x8] sm:$0xf] %vm186, 0
        %190 = vst.msk [vmem:[#allocation2 + $0xc] sm:$0xf] %vm186, 0
        %191 = vst.msk [vmem:[#allocation2 + $0x10] sm:$0xf] %vm186, 0
        %192 = vst.msk [vmem:[#allocation2 + $0x14] sm:$0xf] %vm186, 0
        %193 = vst.msk [vmem:[#allocation2 + $0x18] sm:$0xf] %vm186, 0
        %194 = vst.msk [vmem:[#allocation2 + $0x1c] sm:$0xf] %vm186, 0
        %195 = vst.msk [vmem:[#allocation2 + $0x20] sm:$0xf] %vm186, 0
        %196 = vst.msk [vmem:[#allocation2 + $0x24] sm:$0xf] %vm186, 0
        %197 = vst.msk [vmem:[#allocation2 + $0x28] sm:$0xf] %vm186, 0
        %198 = vst.msk [vmem:[#allocation2 + $0x2c] sm:$0xf] %vm186, 0
        %199 = vst.msk [vmem:[#allocation2 + $0x30] sm:$0xf] %vm186, 0
        %200 = vst.msk [vmem:[#allocation2 + $0x34] sm:$0xf] %vm186, 0
        %201 = vst.msk [vmem:[#allocation2 + $0x38] sm:$0xf] %vm186, 0
        %202 = vst.msk [vmem:[#allocation2 + $0x3c] sm:$0xf] %vm186, 0
        %203 = vst.msk [vmem:[#allocation2 + $0x40] sm:$0xf] %vm186, 0
        %204 = vst.msk [vmem:[#allocation2 + $0x44] sm:$0xf] %vm186, 0
        %205 = vst.msk [vmem:[#allocation2 + $0x48] sm:$0xf] %vm186, 0
        %206 = vst.msk [vmem:[#allocation2 + $0x4c] sm:$0xf] %vm186, 0
        %207 = vst.msk [vmem:[#allocation2 + $0x50] sm:$0xf] %vm186, 0
        %208 = vst.msk [vmem:[#allocation2 + $0x54] sm:$0xf] %vm186, 0
        %209 = vst.msk [vmem:[#allocation2 + $0x58] sm:$0xf] %vm186, 0
        %vm210 = vcmask 254976
        %211 = vst.msk [vmem:[#allocation2 + $0x5c] sm:$0x3] %vm210, 0
        %p212 = scmp.gt.s32.totalorder %s22, 0
        // Predicated region
        $region33: #{tpu_custom_call.1} parent=31 // pred_check
          %p213 = pneg %p212
        $region34: #{tpu_custom_call.1} parent=31 // pred_check_branch
          %215 = sbr.rel (%p213) target = $region36
        $region35: #{tpu_custom_call.1} parent=31 // pred_region
          %s216 = ssub.s32 %s185, 1
          %s217 = smul.u32 %s216, 2
          %s218 = smul.addr %s217, 4
          %s219 = scalar_lea.vmem %s182, %s218
          %v220 = vld [vmem:[%s219] sm:$0xf]
          %v221 = vld [vmem:[%s219 + $0x4] sm:$0xf]
          %vm222 = vsmask.f32 256
          %vm223 = vsmask.f32 4368
          %vm224 = vmor %vm222, %vm223
          %v226 = vshrl.u32 %v220, 16
          %v228 = vrot.slane %v226, 7
          %v229 = vshll.u32 %v220, 16
          %v231 = vor.u32 %v228, %v229
          %v232 = vrot.slane %v228, 4
          %v234 = vshrl.u32 %v221, 16
          %v236 = vrot.slane %v234, 7
          %v237 = vshll.u32 %v221, 16
          %v239 = vor.u32 %v236, %v237
          %v240 = vsel %vm224, %v232, %v239
          %v241 = vrot.slane %v236, 4
          %vm245 = vcmask 257024
          %vm246 = vsmask.f32 7938
          %vm247 = vmand %vm245, %vm246
          %v248 = vld [vmem:[#allocation2] sm:$0xf]
          %v249 = vsel %vm247, %v231, %v248
          %250 = vst [vmem:[#allocation2] sm:$0xf] %v249
          %251 = vst.msk [vmem:[#allocation2 + $0x4] sm:$0xf] %vm186, %v240
          %vm252 = vcmask 253952
          %vm253 = vmand %vm252, %vm222
          %v254 = vld [vmem:[#allocation2 + $0x8] sm:$0x1]
          %v255 = vsel %vm253, %v241, %v254
          %256 = vst [vmem:[#allocation2 + $0x8] sm:$0x1] %v255
        $region36: #{tpu_custom_call.1} parent=31 // pred_fallthru
          _
        %s257 = smul.u32 %s185, 2
        %s258 = smul.addr %s257, 4
        %s259 = scalar_lea.vmem %s182, %s258
        %v260 = vld [vmem:[%s259] sm:$0xf]
        %v261 = vld [vmem:[%s259 + $0x4] sm:$0xf]
        %vm262 = vsmask.f32 1280
        %vm263 = vsmask.f32 5392
        %vm264 = vmor %vm262, %vm263
        %v266 = vshrl.u32 %v260, 16
        %v268 = vrot.slane %v266, 6
        %v269 = vshll.u32 %v260, 16
        %v271 = vrot.slane %v269, 7
        %v272 = vor.u32 %v268, %v271
        %v273 = vrot.slane %v272, 4
        %v275 = vshrl.u32 %v261, 16
        %v277 = vrot.slane %v275, 6
        %v278 = vshll.u32 %v261, 16
        %v280 = vrot.slane %v278, 7
        %v281 = vor.u32 %v277, %v280
        %v282 = vsel %vm264, %v273, %v281
        %v283 = vrot.slane %v281, 4
        %vm287 = vcmask 257025
        %vm288 = vsmask.f32 7942
        %vm289 = vmand %vm287, %vm288
        %v290 = vld [vmem:[#allocation2 + $0x8] sm:$0xe]
        %v291 = vsel %vm289, %v272, %v290
        %292 = vst [vmem:[#allocation2 + $0x8] sm:$0xe] %v291
        %293 = vst.msk [vmem:[#allocation2 + $0xc] sm:$0xf] %vm186, %v282
        %vm294 = vcmask 254976
        %vm295 = vmand %vm294, %vm262
        %v296 = vld [vmem:[#allocation2 + $0x10] sm:$0x3]
        %v297 = vsel %vm295, %v283, %v296
        %298 = vst [vmem:[#allocation2 + $0x10] sm:$0x3] %v297
        %s299 = sadd.s32 %s185, 1
        %s300 = smul.u32 %s299, 2
        %s301 = smul.addr %s300, 4
        %s302 = scalar_lea.vmem %s182, %s301
        %v303 = vld [vmem:[%s302] sm:$0xf]
        %v304 = vld [vmem:[%s302 + $0x4] sm:$0xf]
        %vm305 = vsmask.f32 2304
        %vm306 = vsmask.f32 6416
        %vm307 = vmor %vm305, %vm306
        %v309 = vshrl.u32 %v303, 16
        %v311 = vrot.slane %v309, 5
        %v312 = vshll.u32 %v303, 16
        %v314 = vrot.slane %v312, 6
        %v315 = vor.u32 %v311, %v314
        %v316 = vrot.slane %v315, 4
        %v318 = vshrl.u32 %v304, 16
        %v320 = vrot.slane %v318, 5
        %v321 = vshll.u32 %v304, 16
        %v323 = vrot.slane %v321, 6
        %v324 = vor.u32 %v320, %v323
        %v325 = vsel %vm307, %v316, %v324
        %v326 = vrot.slane %v324, 4
        %vm330 = vcmask 257026
        %vm331 = vsmask.f32 7946
        %vm332 = vmand %vm330, %vm331
        %v333 = vld [vmem:[#allocation2 + $0x10] sm:$0xc]
        %v334 = vsel %vm332, %v315, %v333
        %335 = vst [vmem:[#allocation2 + $0x10] sm:$0xc] %v334
        %336 = vst.msk [vmem:[#allocation2 + $0x14] sm:$0xf] %vm186, %v325
        %vm337 = vcmask 256000
        %vm338 = vmand %vm337, %vm305
        %v339 = vld [vmem:[#allocation2 + $0x18] sm:$0x7]
        %v340 = vsel %vm338, %v326, %v339
        %341 = vst [vmem:[#allocation2 + $0x18] sm:$0x7] %v340
        %s342 = sadd.s32 %s185, 2
        %s343 = smul.u32 %s342, 2
        %s344 = smul.addr %s343, 4
        %s345 = scalar_lea.vmem %s182, %s344
        %v346 = vld [vmem:[%s345] sm:$0xf]
        %v347 = vld [vmem:[%s345 + $0x4] sm:$0xf]
        %vm348 = vsmask.f32 3328
        %vm349 = vsmask.f32 7440
        %vm350 = vmor %vm348, %vm349
        %v352 = vshll.u32 %v346, 16
        %v354 = vrot.slane %v352, 5
        %v355 = vshrl.u32 %v346, 16
        %v357 = vrot.slane %v355, 4
        %v358 = vor.u32 %v357, %v354
        %v359 = vrot.slane %v358, 4
        %v361 = vshll.u32 %v347, 16
        %v363 = vrot.slane %v361, 5
        %v364 = vsel %vm350, %v359, %v363
        %v365 = vshrl.u32 %v347, 16
        %v367 = vrot.slane %v365, 4
        %v368 = vor.u32 %v367, %v363
        %v369 = vrot.slane %v368, 4
        %vm373 = vcmask 257027
        %vm374 = vsmask.f32 7950
        %vm375 = vmand %vm373, %vm374
        %v376 = vld [vmem:[#allocation2 + $0x18] sm:$0x8]
        %v377 = vsel %vm375, %v354, %v376
        %378 = vst [vmem:[#allocation2 + $0x18] sm:$0x8] %v377
        %379 = vst.msk [vmem:[#allocation2 + $0x1c] sm:$0xf] %vm186, %v364
        %vm380 = vcmask 257024
        %vm381 = vmand %vm380, %vm348
        %v382 = vld [vmem:[#allocation2 + $0x20] sm:$0xf]
        %v383 = vsel %vm381, %v369, %v382
        %384 = vst [vmem:[#allocation2 + $0x20] sm:$0xf] %v383
        %s385 = sadd.s32 %s185, 3
        %s386 = smul.u32 %s385, 2
        %s387 = smul.addr %s386, 4
        %s388 = scalar_lea.vmem %s182, %s387
        %v389 = vld [vmem:[%s388] sm:$0xf]
        %v390 = vld [vmem:[%s388 + $0x4] sm:$0xf]
        %vm391 = vsmask.f32 256
        %vm392 = vsmask.f32 4368
        %vm393 = vmor %vm391, %vm392
        %v395 = vshrl.u32 %v389, 16
        %v397 = vrot.slane %v395, 7
        %v398 = vshll.u32 %v389, 16
        %v400 = vor.u32 %v397, %v398
        %v401 = vrot.slane %v397, 4
        %v403 = vshrl.u32 %v390, 16
        %v405 = vrot.slane %v403, 7
        %v406 = vshll.u32 %v390, 16
        %v408 = vor.u32 %v405, %v406
        %v409 = vsel %vm393, %v401, %v408
        %v410 = vrot.slane %v405, 4
        %vm414 = vsmask.f32 7938
        %vm415 = vmand %vm380, %vm414
        %v416 = vld [vmem:[#allocation2 + $0x24] sm:$0xf]
        %v417 = vsel %vm415, %v400, %v416
        %418 = vst [vmem:[#allocation2 + $0x24] sm:$0xf] %v417
        %419 = vst.msk [vmem:[#allocation2 + $0x28] sm:$0xf] %vm186, %v409
        %vm420 = vcmask 253952
        %vm421 = vmand %vm420, %vm391
        %v422 = vld [vmem:[#allocation2 + $0x2c] sm:$0x1]
        %v423 = vsel %vm421, %v410, %v422
        %424 = vst [vmem:[#allocation2 + $0x2c] sm:$0x1] %v423
        %s425 = sadd.s32 %s185, 4
        %s426 = smul.u32 %s425, 2
        %s427 = smul.addr %s426, 4
        %s428 = scalar_lea.vmem %s182, %s427
        %v429 = vld [vmem:[%s428] sm:$0xf]
        %v430 = vld [vmem:[%s428 + $0x4] sm:$0xf]
        %v432 = vshrl.u32 %v429, 16
        %v434 = vrot.slane %v432, 6
        %v435 = vshll.u32 %v429, 16
        %v437 = vrot.slane %v435, 7
        %v438 = vor.u32 %v434, %v437
        %v439 = vrot.slane %v438, 4
        %v441 = vshrl.u32 %v430, 16
        %v443 = vrot.slane %v441, 6
        %v444 = vshll.u32 %v430, 16
        %v446 = vrot.slane %v444, 7
        %v447 = vor.u32 %v443, %v446
        %v448 = vsel %vm264, %v439, %v447
        %v449 = vrot.slane %v447, 4
        %v453 = vld [vmem:[#allocation2 + $0x2c] sm:$0xe]
        %v454 = vsel %vm289, %v438, %v453
        %455 = vst [vmem:[#allocation2 + $0x2c] sm:$0xe] %v454
        %456 = vst.msk [vmem:[#allocation2 + $0x30] sm:$0xf] %vm186, %v448
        %v457 = vld [vmem:[#allocation2 + $0x34] sm:$0x3]
        %v458 = vsel %vm295, %v449, %v457
        %459 = vst [vmem:[#allocation2 + $0x34] sm:$0x3] %v458
        %s460 = sadd.s32 %s185, 5
        %s461 = smul.u32 %s460, 2
        %s462 = smul.addr %s461, 4
        %s463 = scalar_lea.vmem %s182, %s462
        %v464 = vld [vmem:[%s463] sm:$0xf]
        %v465 = vld [vmem:[%s463 + $0x4] sm:$0xf]
        %v467 = vshrl.u32 %v464, 16
        %v469 = vrot.slane %v467, 5
        %v470 = vshll.u32 %v464, 16
        %v472 = vrot.slane %v470, 6
        %v473 = vor.u32 %v469, %v472
        %v474 = vrot.slane %v473, 4
        %v476 = vshrl.u32 %v465, 16
        %v478 = vrot.slane %v476, 5
        %v479 = vshll.u32 %v465, 16
        %v481 = vrot.slane %v479, 6
        %v482 = vor.u32 %v478, %v481
        %v483 = vsel %vm307, %v474, %v482
        %v484 = vrot.slane %v482, 4
        %v488 = vld [vmem:[#allocation2 + $0x34] sm:$0xc]
        %v489 = vsel %vm332, %v473, %v488
        %490 = vst [vmem:[#allocation2 + $0x34] sm:$0xc] %v489
        %491 = vst.msk [vmem:[#allocation2 + $0x38] sm:$0xf] %vm186, %v483
        %v492 = vld [vmem:[#allocation2 + $0x3c] sm:$0x7]
        %v493 = vsel %vm338, %v484, %v492
        %494 = vst [vmem:[#allocation2 + $0x3c] sm:$0x7] %v493
        %s495 = sadd.s32 %s185, 6
        %s496 = smul.u32 %s495, 2
        %s497 = smul.addr %s496, 4
        %s498 = scalar_lea.vmem %s182, %s497
        %v499 = vld [vmem:[%s498] sm:$0xf]
        %v500 = vld [vmem:[%s498 + $0x4] sm:$0xf]
        %v502 = vshll.u32 %v499, 16
        %v504 = vrot.slane %v502, 5
        %v505 = vshrl.u32 %v499, 16
        %v507 = vrot.slane %v505, 4
        %v508 = vor.u32 %v507, %v504
        %v509 = vrot.slane %v508, 4
        %v511 = vshll.u32 %v500, 16
        %v513 = vrot.slane %v511, 5
        %v514 = vsel %vm350, %v509, %v513
        %v515 = vshrl.u32 %v500, 16
        %v517 = vrot.slane %v515, 4
        %v518 = vor.u32 %v517, %v513
        %v519 = vrot.slane %v518, 4
        %v523 = vld [vmem:[#allocation2 + $0x3c] sm:$0x8]
        %v524 = vsel %vm375, %v504, %v523
        %525 = vst [vmem:[#allocation2 + $0x3c] sm:$0x8] %v524
        %526 = vst.msk [vmem:[#allocation2 + $0x40] sm:$0xf] %vm186, %v514
        %v527 = vld [vmem:[#allocation2 + $0x44] sm:$0xf]
        %v528 = vsel %vm381, %v519, %v527
        %529 = vst [vmem:[#allocation2 + $0x44] sm:$0xf] %v528
        %s530 = sadd.s32 %s185, 7
        %s531 = smul.u32 %s530, 2
        %s532 = smul.addr %s531, 4
        %s533 = scalar_lea.vmem %s182, %s532
        %v534 = vld [vmem:[%s533] sm:$0xf]
        %v535 = vld [vmem:[%s533 + $0x4] sm:$0xf]
        %v537 = vshrl.u32 %v534, 16
        %v539 = vrot.slane %v537, 7
        %v540 = vshll.u32 %v534, 16
        %v542 = vor.u32 %v539, %v540
        %v543 = vrot.slane %v539, 4
        %v545 = vshrl.u32 %v535, 16
        %v547 = vrot.slane %v545, 7
        %v548 = vshll.u32 %v535, 16
        %v550 = vor.u32 %v547, %v548
        %v551 = vsel %vm393, %v543, %v550
        %v552 = vrot.slane %v547, 4
        %v556 = vld [vmem:[#allocation2 + $0x48] sm:$0xf]
        %v557 = vsel %vm415, %v542, %v556
        %558 = vst [vmem:[#allocation2 + $0x48] sm:$0xf] %v557
        %559 = vst.msk [vmem:[#allocation2 + $0x4c] sm:$0xf] %vm186, %v551
        %v560 = vld [vmem:[#allocation2 + $0x50] sm:$0x1]
        %v561 = vsel %vm421, %v552, %v560
        %562 = vst [vmem:[#allocation2 + $0x50] sm:$0x1] %v561
        %p563 = scmp.lt.s32.totalorder %s22, 1
        // Predicated region
        $region37: #{tpu_custom_call.1} parent=31 // pred_check
          %p564 = pneg %p563
        $region38: #{tpu_custom_call.1} parent=31 // pred_check_branch
          %566 = sbr.rel (%p564) target = $region40
        $region39: #{tpu_custom_call.1} parent=31 // pred_region
          %s567 = sadd.s32 %s185, 8
          %s568 = smul.u32 %s567, 2
          %s569 = smul.addr %s568, 4
          %s570 = scalar_lea.vmem %s182, %s569
          %v571 = vld [vmem:[%s570] sm:$0xf]
          %v572 = vld [vmem:[%s570 + $0x4] sm:$0xf]
          %v574 = vshrl.u32 %v571, 16
          %v576 = vrot.slane %v574, 6
          %v577 = vshll.u32 %v571, 16
          %v579 = vrot.slane %v577, 7
          %v580 = vor.u32 %v576, %v579
          %v581 = vrot.slane %v580, 4
          %v583 = vshrl.u32 %v572, 16
          %v585 = vrot.slane %v583, 6
          %v586 = vshll.u32 %v572, 16
          %v588 = vrot.slane %v586, 7
          %v589 = vor.u32 %v585, %v588
          %v590 = vsel %vm264, %v581, %v589
          %v591 = vrot.slane %v589, 4
          %v595 = vld [vmem:[#allocation2 + $0x50] sm:$0xe]
          %v596 = vsel %vm289, %v580, %v595
          %597 = vst [vmem:[#allocation2 + $0x50] sm:$0xe] %v596
          %598 = vst.msk [vmem:[#allocation2 + $0x54] sm:$0xf] %vm186, %v590
          %v599 = vld [vmem:[#allocation2 + $0x58] sm:$0x3]
          %v600 = vsel %vm295, %v591, %v599
          %601 = vst [vmem:[#allocation2 + $0x58] sm:$0x3] %v600
        $region40: #{tpu_custom_call.1} parent=31 // pred_fallthru
          _
        %v602 = vld [vmem:[#allocation2] sm:$0xf]
        %v603 = vld [vmem:[#allocation2 + $0x4] sm:$0xf]
        %v604 = vld [vmem:[#allocation2 + $0x8] sm:$0xf]
        %v605 = vld [vmem:[#allocation2 + $0xc] sm:$0xf]
        %v606 = vld [vmem:[#allocation2 + $0x10] sm:$0xf]
        %v607 = vld [vmem:[#allocation2 + $0x14] sm:$0xf]
        %v608 = vld [vmem:[#allocation2 + $0x18] sm:$0xf]
        %v609 = vld [vmem:[#allocation2 + $0x1c] sm:$0xf]
        %v610 = vld [vmem:[#allocation2 + $0x20] sm:$0xf]
        %v611 = vld [vmem:[#allocation2 + $0x24] sm:$0xf]
        %v612 = vld [vmem:[#allocation2 + $0x28] sm:$0xf]
        %v613 = vld [vmem:[#allocation2 + $0x2c] sm:$0xf]
        %v614 = vld [vmem:[#allocation2 + $0x30] sm:$0xf]
        %v615 = vld [vmem:[#allocation2 + $0x34] sm:$0xf]
        %v616 = vld [vmem:[#allocation2 + $0x38] sm:$0xf]
        %v617 = vld [vmem:[#allocation2 + $0x3c] sm:$0xf]
        %v618 = vld [vmem:[#allocation2 + $0x40] sm:$0xf]
        %v619 = vld [vmem:[#allocation2 + $0x44] sm:$0xf]
        %v620 = vld [vmem:[#allocation2 + $0x48] sm:$0x1]
        %v621 = vld [vmem:[#allocation2] sm:$0xe]
        %v640 = vunpack.c.l.b16 %v602
        %v641 = vunpack.c.l.b16 %v603
        %v642 = vunpack.c.l.b16 %v604
        %v643 = vunpack.c.l.b16 %v605
        %v644 = vunpack.c.l.b16 %v606
        %v645 = vunpack.c.l.b16 %v607
        %v646 = vunpack.c.l.b16 %v608
        %v647 = vunpack.c.l.b16 %v609
        %v648 = vunpack.c.l.b16 %v610
        %v649 = vunpack.c.l.b16 %v611
        %v650 = vunpack.c.l.b16 %v612
        %v651 = vunpack.c.l.b16 %v613
        %v652 = vunpack.c.l.b16 %v614
        %v653 = vunpack.c.l.b16 %v615
        %v654 = vunpack.c.l.b16 %v616
        %v655 = vunpack.c.l.b16 %v617
        %v656 = vunpack.c.l.b16 %v618
        %v657 = vunpack.c.l.b16 %v619
        %v658 = vpack.c.b16 %v641, %v640
        %v659 = vpack.c.b16 %v643, %v642
        %v660 = vpack.c.b16 %v645, %v644
        %v661 = vpack.c.b16 %v647, %v646
        %v662 = vpack.c.b16 %v649, %v648
        %v663 = vpack.c.b16 %v651, %v650
        %v664 = vpack.c.b16 %v653, %v652
        %v665 = vpack.c.b16 %v655, %v654
        %v666 = vpack.c.b16 %v657, %v656
        %v668 = vunpack.c.l.b16 %v620
        %v669 = vpack.c.b16 %v668, %v668
        %vm670 = vsmask.f32 7424
        %v672 = vshrl.u32 %v658, 16
        %v674 = vshll.u32 %v658, 16
        %v676 = vrot.slane %v674, 1
        %v677 = vor.u32 %v672, %v676
        %v679 = vshll.u32 %v659, 16
        %v681 = vrot.slane %v679, 1
        %v682 = vsel %vm670, %v677, %v681
        %v683 = vshrl.u32 %v659, 16
        %v685 = vor.u32 %v683, %v681
        %v687 = vshll.u32 %v660, 16
        %v689 = vrot.slane %v687, 1
        %v690 = vsel %vm670, %v685, %v689
        %v691 = vshrl.u32 %v660, 16
        %v693 = vor.u32 %v691, %v689
        %v695 = vshll.u32 %v661, 16
        %v697 = vrot.slane %v695, 1
        %v698 = vsel %vm670, %v693, %v697
        %v699 = vshrl.u32 %v661, 16
        %v701 = vor.u32 %v699, %v697
        %v703 = vshll.u32 %v662, 16
        %v705 = vrot.slane %v703, 1
        %v706 = vsel %vm670, %v701, %v705
        %v707 = vshrl.u32 %v662, 16
        %v709 = vor.u32 %v707, %v705
        %v711 = vshll.u32 %v663, 16
        %v713 = vrot.slane %v711, 1
        %v714 = vsel %vm670, %v709, %v713
        %v715 = vshrl.u32 %v663, 16
        %v717 = vor.u32 %v715, %v713
        %v719 = vshll.u32 %v664, 16
        %v721 = vrot.slane %v719, 1
        %v722 = vsel %vm670, %v717, %v721
        %v723 = vshrl.u32 %v664, 16
        %v725 = vor.u32 %v723, %v721
        %v727 = vshll.u32 %v665, 16
        %v729 = vrot.slane %v727, 1
        %v730 = vsel %vm670, %v725, %v729
        %v731 = vshrl.u32 %v665, 16
        %v733 = vor.u32 %v731, %v729
        %v735 = vshll.u32 %v666, 16
        %v737 = vrot.slane %v735, 1
        %v738 = vsel %vm670, %v733, %v737
        %v739 = vshrl.u32 %v666, 16
        %v741 = vor.u32 %v739, %v737
        %v743 = vshll.u32 %v669, 16
        %v745 = vrot.slane %v743, 1
        %v746 = vsel %vm670, %v741, %v745
        %747 = vrot.lane.b32.xlu0 %v682, 32
        %v748 = vpop.permute.xlu0 %747
        %749 = vrot.lane.b32.xlu0 %v690, 32
        %v750 = vpop.permute.xlu0 %749
        %751 = vrot.lane.b32.xlu0 %v698, 32
        %v752 = vpop.permute.xlu0 %751
        %753 = vrot.lane.b32.xlu0 %v706, 32
        %v754 = vpop.permute.xlu0 %753
        %755 = vrot.lane.b32.xlu0 %v714, 32
        %v756 = vpop.permute.xlu0 %755
        %757 = vrot.lane.b32.xlu0 %v722, 32
        %v758 = vpop.permute.xlu0 %757
        %759 = vrot.lane.b32.xlu0 %v730, 32
        %v760 = vpop.permute.xlu0 %759
        %761 = vrot.lane.b32.xlu0 %v738, 32
        %v762 = vpop.permute.xlu0 %761
        %763 = vrot.lane.b32.xlu0 %v746, 32
        %v764 = vpop.permute.xlu0 %763
        %v766 = vunpack.c.l.b16 %v621
        %v767 = vpack.c.b16 %v641, %v766
        %vm768 = vcmask 1046528
        %v769 = vrot.slane %v767, 1
        %v770 = vrot.slane %v659, 1
        %v771 = vsel %vm768, %v769, %v770
        %v772 = vrot.slane %v660, 1
        %v773 = vsel %vm768, %v770, %v772
        %v774 = vrot.slane %v661, 1
        %v775 = vsel %vm768, %v772, %v774
        %v776 = vrot.slane %v662, 1
        %v777 = vsel %vm768, %v774, %v776
        %v778 = vrot.slane %v663, 1
        %v779 = vsel %vm768, %v776, %v778
        %v780 = vrot.slane %v664, 1
        %v781 = vsel %vm768, %v778, %v780
        %v782 = vrot.slane %v665, 1
        %v783 = vsel %vm768, %v780, %v782
        %v784 = vrot.slane %v666, 1
        %v785 = vsel %vm768, %v782, %v784
        %v786 = vrot.slane %v669, 1
        %v787 = vsel %vm768, %v784, %v786
        %788 = vrot.lane.b32.xlu0 %v771, 64
        %v789 = vpop.permute.xlu0 %788
        %790 = vrot.lane.b32.xlu0 %v773, 64
        %v791 = vpop.permute.xlu0 %790
        %792 = vrot.lane.b32.xlu0 %v775, 64
        %v793 = vpop.permute.xlu0 %792
        %794 = vrot.lane.b32.xlu0 %v777, 64
        %v795 = vpop.permute.xlu0 %794
        %796 = vrot.lane.b32.xlu0 %v779, 64
        %v797 = vpop.permute.xlu0 %796
        %798 = vrot.lane.b32.xlu0 %v781, 64
        %v799 = vpop.permute.xlu0 %798
        %800 = vrot.lane.b32.xlu0 %v783, 64
        %v801 = vpop.permute.xlu0 %800
        %802 = vrot.lane.b32.xlu0 %v785, 64
        %v803 = vpop.permute.xlu0 %802
        %804 = vrot.lane.b32.xlu0 %v787, 64
        %v805 = vpop.permute.xlu0 %804
        %vm806 = vcmask 261120
        %v808 = vsel %vm806, %v658, %v748
        %v810 = vsel %vm806, %v659, %v750
        %v812 = vsel %vm806, %v660, %v752
        %v814 = vsel %vm806, %v661, %v754
        %v816 = vsel %vm806, %v662, %v756
        %v818 = vsel %vm806, %v663, %v758
        %v820 = vsel %vm806, %v664, %v760
        %v822 = vsel %vm806, %v665, %v762
        %v824 = vsel %vm806, %v666, %v764
        %vm825 = vcmask 523264
        %v827 = vsel %vm825, %v808, %v789
        %v829 = vsel %vm825, %v810, %v791
        %v831 = vsel %vm825, %v812, %v793
        %v833 = vsel %vm825, %v814, %v795
        %v835 = vsel %vm825, %v816, %v797
        %v837 = vsel %vm825, %v818, %v799
        %v839 = vsel %vm825, %v820, %v801
        %v841 = vsel %vm825, %v822, %v803
        %v843 = vsel %vm825, %v824, %v805
        %v844 = vld [vmem:[%s1] sm:$0xf]
        %v845 = vld [vmem:[%s1 + $0x4] sm:$0xf]
        %v846 = vld [vmem:[%s1 + $0x8] sm:$0xf]
        %v847 = vld [vmem:[%s1 + $0xc] sm:$0xf]
        %v848 = vld [vmem:[%s1 + $0x10] sm:$0xf]
        %v849 = vld [vmem:[%s1 + $0x14] sm:$0xf]
        %v850 = vld [vmem:[%s1 + $0x18] sm:$0xf]
        %v851 = vld [vmem:[%s1 + $0x1c] sm:$0xf]
        %v852 = vld [vmem:[%s1 + $0x20] sm:$0xf]
        %v853 = vld [vmem:[%s1 + $0x24] sm:$0xf]
        %v854 = vld [vmem:[%s1 + $0x28] sm:$0xf]
        %v855 = vld [vmem:[%s1 + $0x2c] sm:$0xf]
        %v856 = vld [vmem:[#allocation2 + $0x8] sm:$0xe]
        %v857 = vld [vmem:[#allocation2 + $0x48] sm:$0xf]
        %v858 = vld [vmem:[#allocation2 + $0x4c] sm:$0xf]
        %v859 = vld [vmem:[#allocation2 + $0x50] sm:$0x1]
        %v860 = vld [vmem:[#allocation2 + $0x50] sm:$0x3]
        %v861 = vld [vmem:[#allocation2 + $0x8] sm:$0xc]
        %v866 = vunpack.c.l.b16 %v856
        %v867 = vunpack.c.l.b16 %v857
        %v868 = vunpack.c.l.b16 %v858
        %v869 = vunpack.c.l.b16 %v859
        %v870 = vpack.c.b16 %v643, %v866
        %v871 = vpack.c.b16 %v868, %v867
        %v872 = vpack.c.b16 %v869, %v869
        %v874 = vunpack.c.l.b16 %v860
        %v875 = vpack.c.b16 %v874, %v874
        %v877 = vshrl.u32 %v870, 16
        %v879 = vshll.u32 %v870, 16
        %v881 = vrot.slane %v879, 1
        %v882 = vor.u32 %v877, %v881
        %v883 = vsel %vm670, %v882, %v689
        %v885 = vshll.u32 %v871, 16
        %v887 = vrot.slane %v885, 1
        %v888 = vsel %vm670, %v741, %v887
        %v889 = vshrl.u32 %v871, 16
        %v891 = vor.u32 %v889, %v887
        %v893 = vshll.u32 %v875, 16
        %v895 = vrot.slane %v893, 1
        %v896 = vsel %vm670, %v891, %v895
        %v897 = vshrl.u32 %v875, 16
        %v899 = vor.u32 %v897, %v895
        %900 = vrot.lane.b32.xlu0 %v883, 32
        %v901 = vpop.permute.xlu0 %900
        %902 = vrot.lane.b32.xlu0 %v888, 32
        %v903 = vpop.permute.xlu0 %902
        %904 = vrot.lane.b32.xlu0 %v896, 32
        %v905 = vpop.permute.xlu0 %904
        %906 = vrot.lane.b32.xlu0 %v899, 32
        %v907 = vpop.permute.xlu0 %906
        %v909 = vunpack.c.l.b16 %v861
        %v910 = vpack.c.b16 %v643, %v909
        %v911 = vrot.slane %v910, 1
        %v912 = vsel %vm768, %v911, %v772
        %v913 = vrot.slane %v871, 1
        %v914 = vsel %vm768, %v784, %v913
        %v915 = vrot.slane %v875, 1
        %v916 = vsel %vm768, %v913, %v915
        %917 = vrot.lane.b32.xlu0 %v912, 64
        %v918 = vpop.permute.xlu0 %917
        %919 = vrot.lane.b32.xlu0 %v914, 64
        %v920 = vpop.permute.xlu0 %919
        %921 = vrot.lane.b32.xlu0 %v916, 64
        %v922 = vpop.permute.xlu0 %921
        %923 = vrot.lane.b32.xlu0 %v915, 64
        %v924 = vpop.permute.xlu0 %923
        %v926 = vsel %vm806, %v870, %v901
        %v928 = vsel %vm806, %v666, %v903
        %v930 = vsel %vm806, %v871, %v905
        %v933 = vsel %vm806, %v872, %v907
        %v935 = vsel %vm825, %v926, %v918
        %v937 = vsel %vm825, %v928, %v920
        %v939 = vsel %vm825, %v930, %v922
        %v941 = vsel %vm825, %v933, %v924
        %s942 = scalar_lea.vmem %s1, 48
        %v943 = vld [vmem:[%s942] sm:$0xf]
        %v944 = vld [vmem:[%s942 + $0x4] sm:$0xf]
        %v945 = vld [vmem:[%s942 + $0x8] sm:$0xf]
        %v946 = vld [vmem:[%s942 + $0xc] sm:$0xf]
        %v947 = vld [vmem:[%s942 + $0x10] sm:$0xf]
        %v948 = vld [vmem:[%s942 + $0x14] sm:$0xf]
        %v949 = vld [vmem:[%s942 + $0x18] sm:$0xf]
        %v950 = vld [vmem:[%s942 + $0x1c] sm:$0xf]
        %v951 = vld [vmem:[%s942 + $0x20] sm:$0xf]
        %v952 = vld [vmem:[%s942 + $0x24] sm:$0xf]
        %v953 = vld [vmem:[%s942 + $0x28] sm:$0xf]
        %v954 = vld [vmem:[%s942 + $0x2c] sm:$0xf]
        %v965 = vrot.slane %v935, 1
        %v966 = vrot.slane %v831, 1
        %v967 = vsel %vm768, %v965, %v966
        %v968 = vrot.slane %v833, 1
        %v969 = vsel %vm768, %v966, %v968
        %v970 = vrot.slane %v835, 1
        %v971 = vsel %vm768, %v968, %v970
        %v972 = vrot.slane %v837, 1
        %v973 = vsel %vm768, %v970, %v972
        %v974 = vrot.slane %v839, 1
        %v975 = vsel %vm768, %v972, %v974
        %v976 = vrot.slane %v841, 1
        %v977 = vsel %vm768, %v974, %v976
        %v978 = vrot.slane %v937, 1
        %v979 = vsel %vm768, %v976, %v978
        %v980 = vrot.slane %v939, 1
        %v981 = vsel %vm768, %v978, %v980
        %v982 = vrot.slane %v941, 1
        %v983 = vsel %vm768, %v980, %v982
        %v996 = vunpack.c.l.b16 %v943
        %v997 = vunpack.c.l.b16 %v944
        %v998 = vunpack.c.l.b16 %v945
        %v999 = vunpack.c.l.b16 %v946
        %v1000 = vunpack.c.l.b16 %v947
        %v1001 = vunpack.c.l.b16 %v948
        %v1002 = vunpack.c.l.b16 %v949
        %v1003 = vunpack.c.l.b16 %v950
        %v1004 = vunpack.c.l.b16 %v951
        %v1005 = vunpack.c.l.b16 %v952
        %v1006 = vunpack.c.l.b16 %v953
        %v1007 = vunpack.c.l.b16 %v954
        %v1008 = vpack.c.b16 %v997, %v996
        %v1009 = vpack.c.b16 %v999, %v998
        %v1010 = vpack.c.b16 %v1001, %v1000
        %v1011 = vpack.c.b16 %v1003, %v1002
        %v1012 = vpack.c.b16 %v1005, %v1004
        %v1013 = vpack.c.b16 %v1007, %v1006
        %vm1020 = vcmask 785408
        %v1022 = vsel %vm1020, %v967, 0
        %v1025 = vsel %vm1020, %v969, 0
        %v1028 = vsel %vm1020, %v971, 0
        %v1031 = vsel %vm1020, %v973, 0
        %v1034 = vsel %vm1020, %v975, 0
        %v1037 = vsel %vm1020, %v977, 0
        %v1040 = vsel %vm1020, %v979, 0
        %v1043 = vsel %vm1020, %v981, 0
        %v1046 = vsel %vm1020, %v983, 0
        %1048 = vmatprep.subr.bf16.mxu0 0
        %1049 = vmatpush1.bf16.msra.mxu0 %v1008
        %1050 = vmatprep.subr.bf16.mxu0 0
        %1051 = vmatpush1.bf16.msra.mxu0 %v1009
        %1052 = vmatprep.subr.bf16.mxu0 0
        %1053 = vmatpush1.bf16.msra.mxu0 %v1010
        %1054 = vmatprep.subr.bf16.mxu0 0
        %1055 = vmatpush1.bf16.msra.mxu0 %v1011
        %1056 = vmatprep.subr.bf16.mxu0 0
        %1057 = vmatpush1.bf16.msra.mxu0 %v1012
        %1058 = vmatprep.subr.bf16.mxu0 0
        %1059 = vmatpush1.bf16.msra.mxu0 %v1013
        %1060 = vmatprep.subr.bf16.mxu0 0
        %1061 = vmatpush1.bf16.msra.mxu0 0
        %1062 = vmatprep.subr.bf16.mxu0 0
        %1063 = vmatpush1.bf16.msra.mxu0 0
        %1064 = vmatprep.subr.bf16.mxu0 0
        %1065 = vmatpush1.bf16.msra.mxu0 0
        %1066 = vmatprep.subr.bf16.mxu0 0
        %1067 = vmatpush1.bf16.msra.mxu0 0
        %1068 = vmatprep.subr.bf16.mxu0 0
        %1069 = vmatpush1.bf16.msra.mxu0 0
        %1070 = vmatprep.subr.bf16.mxu0 0
        %1071 = vmatpush1.bf16.msra.mxu0 0
        %1072 = vmatprep.subr.bf16.mxu0 0
        %1073 = vmatpush1.bf16.msra.mxu0 0
        %1074 = vmatprep.subr.bf16.mxu0 0
        %1075 = vmatpush1.bf16.msra.mxu0 0
        %1076 = vmatprep.subr.bf16.mxu0 0
        %1077 = vmatpush1.bf16.msra.mxu0 0
        %1078 = vmatprep.subr.bf16.mxu0 0
        %1079 = vmatpush1.bf16.msra.mxu0 0
        %1080 = vmatprep.mubr.bf16.mxu0 0
        %1081 = vmatmul.mubr.bf16.gmra.mrb[0].mxu0 %v1022
        %v1082 = vpop.f32.mrb[0].mxu0
        %v1083 = vadd.f32 0.0, %v1082
        %v1084 = vpop.f32.mrb[0].mxu0
        %v1085 = vpop.f32.mrb[0].mxu0
        %v1086 = vadd.f32 0.0, %v1085
        %v1087 = vpop.f32.mrb[0].mxu0
        %1088 = vmatprep.mubr.bf16.mxu0 0
        %1089 = vmatmul.mubr.bf16.gmra.mrb[0].mxu0 %v1025
        %v1090 = vpop.f32.mrb[0].mxu0
        %v1091 = vadd.f32 0.0, %v1090
        %v1092 = vpop.f32.mrb[0].mxu0
        %v1093 = vpop.f32.mrb[0].mxu0
        %v1094 = vadd.f32 0.0, %v1093
        %v1095 = vpop.f32.mrb[0].mxu0
        %1096 = vmatprep.mubr.bf16.mxu0 0
        %1097 = vmatmul.mubr.bf16.gmra.mrb[0].mxu0 %v1028
        %v1098 = vpop.f32.mrb[0].mxu0
        %v1099 = vadd.f32 0.0, %v1098
        %v1100 = vpop.f32.mrb[0].mxu0
        %v1101 = vpop.f32.mrb[0].mxu0
        %v1102 = vadd.f32 0.0, %v1101
        %v1103 = vpop.f32.mrb[0].mxu0
        %1104 = vmatprep.mubr.bf16.mxu0 0
        %1105 = vmatmul.mubr.bf16.gmra.mrb[0].mxu0 %v1031
        %v1106 = vpop.f32.mrb[0].mxu0
        %v1107 = vadd.f32 0.0, %v1106
        %v1108 = vpop.f32.mrb[0].mxu0
        %v1109 = vpop.f32.mrb[0].mxu0
        %v1110 = vadd.f32 0.0, %v1109
        %v1111 = vpop.f32.mrb[0].mxu0
        %1112 = vmatprep.mubr.bf16.mxu0 0
        %1113 = vmatmul.mubr.bf16.gmra.mrb[0].mxu0 %v1034
        %v1114 = vpop.f32.mrb[0].mxu0
        %v1115 = vadd.f32 0.0, %v1114
        %v1116 = vpop.f32.mrb[0].mxu0
        %v1117 = vpop.f32.mrb[0].mxu0
        %v1118 = vadd.f32 0.0, %v1117
        %v1119 = vpop.f32.mrb[0].mxu0
        %1120 = vmatprep.mubr.bf16.mxu0 0
        %1121 = vmatmul.mubr.bf16.gmra.mrb[0].mxu0 %v1037
        %v1122 = vpop.f32.mrb[0].mxu0
        %v1123 = vadd.f32 0.0, %v1122
        %v1124 = vpop.f32.mrb[0].mxu0
        %v1125 = vpop.f32.mrb[0].mxu0
        %v1126 = vadd.f32 0.0, %v1125
        %v1127 = vpop.f32.mrb[0].mxu0
        %1128 = vmatprep.mubr.bf16.mxu0 0
        %1129 = vmatmul.mubr.bf16.gmra.mrb[0].mxu0 %v1040
        %v1130 = vpop.f32.mrb[0].mxu0
        %v1131 = vadd.f32 0.0, %v1130
        %v1132 = vpop.f32.mrb[0].mxu0
        %v1133 = vpop.f32.mrb[0].mxu0
        %v1134 = vadd.f32 0.0, %v1133
        %v1135 = vpop.f32.mrb[0].mxu0
        %1136 = vmatprep.mubr.bf16.mxu0 0
        %1137 = vmatmul.mubr.bf16.gmra.mrb[0].mxu0 %v1043
        %v1138 = vpop.f32.mrb[0].mxu0
        %v1139 = vadd.f32 0.0, %v1138
        %v1140 = vpop.f32.mrb[0].mxu0
        %v1141 = vpop.f32.mrb[0].mxu0
        %v1142 = vadd.f32 0.0, %v1141
        %v1143 = vpop.f32.mrb[0].mxu0
        %1144 = vmatprep.mubr.bf16.mxu0 0
        %1145 = vmatmul.mubr.bf16.gmra.mrb[0].mxu0 %v1046
        %v1146 = vpop.f32.mrb[0].mxu0
        %v1147 = vadd.f32 0.0, %v1146
        %v1148 = vpop.f32.mrb[0].mxu0
        %v1149 = vpop.f32.mrb[0].mxu0
        %v1150 = vadd.f32 0.0, %v1149
        %v1151 = vpop.f32.mrb[0].mxu0
        %1152 = vdwg.mxu0
        %v1165 = vunpack.c.l.b16 %v844
        %v1166 = vunpack.c.l.b16 %v845
        %v1167 = vunpack.c.l.b16 %v846
        %v1168 = vunpack.c.l.b16 %v847
        %v1169 = vunpack.c.l.b16 %v848
        %v1170 = vunpack.c.l.b16 %v849
        %v1171 = vunpack.c.l.b16 %v850
        %v1172 = vunpack.c.l.b16 %v851
        %v1173 = vunpack.c.l.b16 %v852
        %v1174 = vunpack.c.l.b16 %v853
        %v1175 = vunpack.c.l.b16 %v854
        %v1176 = vunpack.c.l.b16 %v855
        %v1177 = vpack.c.b16 %v1166, %v1165
        %v1178 = vpack.c.b16 %v1168, %v1167
        %v1179 = vpack.c.b16 %v1170, %v1169
        %v1180 = vpack.c.b16 %v1172, %v1171
        %v1181 = vpack.c.b16 %v1174, %v1173
        %v1182 = vpack.c.b16 %v1176, %v1175
        %v1189 = vsel %vm1020, %v827, 0
        %v1191 = vsel %vm1020, %v829, 0
        %v1193 = vsel %vm1020, %v831, 0
        %v1195 = vsel %vm1020, %v833, 0
        %v1197 = vsel %vm1020, %v835, 0
        %v1199 = vsel %vm1020, %v837, 0
        %v1201 = vsel %vm1020, %v839, 0
        %v1203 = vsel %vm1020, %v841, 0
        %v1205 = vsel %vm1020, %v843, 0
        %1207 = vmatprep.subr.bf16.mxu0 0
        %1208 = vmatpush1.bf16.msra.mxu0 %v1177
        %1209 = vmatprep.subr.bf16.mxu0 0
        %1210 = vmatpush1.bf16.msra.mxu0 %v1178
        %1211 = vmatprep.subr.bf16.mxu0 0
        %1212 = vmatpush1.bf16.msra.mxu0 %v1179
        %1213 = vmatprep.subr.bf16.mxu0 0
        %1214 = vmatpush1.bf16.msra.mxu0 %v1180
        %1215 = vmatprep.subr.bf16.mxu0 0
        %1216 = vmatpush1.bf16.msra.mxu0 %v1181
        %1217 = vmatprep.subr.bf16.mxu0 0
        %1218 = vmatpush1.bf16.msra.mxu0 %v1182
        %1219 = vmatprep.subr.bf16.mxu0 0
        %1220 = vmatpush1.bf16.msra.mxu0 0
        %1221 = vmatprep.subr.bf16.mxu0 0
        %1222 = vmatpush1.bf16.msra.mxu0 0
        %1223 = vmatprep.subr.bf16.mxu0 0
        %1224 = vmatpush1.bf16.msra.mxu0 0
        %1225 = vmatprep.subr.bf16.mxu0 0
        %1226 = vmatpush1.bf16.msra.mxu0 0
        %1227 = vmatprep.subr.bf16.mxu0 0
        %1228 = vmatpush1.bf16.msra.mxu0 0
        %1229 = vmatprep.subr.bf16.mxu0 0
        %1230 = vmatpush1.bf16.msra.mxu0 0
        %1231 = vmatprep.subr.bf16.mxu0 0
        %1232 = vmatpush1.bf16.msra.mxu0 0
        %1233 = vmatprep.subr.bf16.mxu0 0
        %1234 = vmatpush1.bf16.msra.mxu0 0
        %1235 = vmatprep.subr.bf16.mxu0 0
        %1236 = vmatpush1.bf16.msra.mxu0 0
        %1237 = vmatprep.subr.bf16.mxu0 0
        %1238 = vmatpush1.bf16.msra.mxu0 0
        %1239 = vmatprep.mubr.bf16.mxu0 0
        %1240 = vmatmul.mubr.bf16.gmra.mrb[0].mxu0 %v1189
        %v1241 = vpop.f32.mrb[0].mxu0
        %v1242 = vadd.f32 %v1083, %v1241
        %v1243 = vpop.f32.mrb[0].mxu0
        %v1244 = vpop.f32.mrb[0].mxu0
        %v1245 = vadd.f32 %v1086, %v1244
        %v1246 = vpop.f32.mrb[0].mxu0
        %1247 = vmatprep.mubr.bf16.mxu0 0
        %1248 = vmatmul.mubr.bf16.gmra.mrb[0].mxu0 %v1191
        %v1249 = vpop.f32.mrb[0].mxu0
        %v1250 = vadd.f32 %v1091, %v1249
        %v1251 = vpop.f32.mrb[0].mxu0
        %v1252 = vpop.f32.mrb[0].mxu0
        %v1253 = vadd.f32 %v1094, %v1252
        %v1254 = vpop.f32.mrb[0].mxu0
        %1255 = vmatprep.mubr.bf16.mxu0 0
        %1256 = vmatmul.mubr.bf16.gmra.mrb[0].mxu0 %v1193
        %v1257 = vpop.f32.mrb[0].mxu0
        %v1258 = vadd.f32 %v1099, %v1257
        %v1259 = vpop.f32.mrb[0].mxu0
        %v1260 = vpop.f32.mrb[0].mxu0
        %v1261 = vadd.f32 %v1102, %v1260
        %v1262 = vpop.f32.mrb[0].mxu0
        %1263 = vmatprep.mubr.bf16.mxu0 0
        %1264 = vmatmul.mubr.bf16.gmra.mrb[0].mxu0 %v1195
        %v1265 = vpop.f32.mrb[0].mxu0
        %v1266 = vadd.f32 %v1107, %v1265
        %v1267 = vpop.f32.mrb[0].mxu0
        %v1268 = vpop.f32.mrb[0].mxu0
        %v1269 = vadd.f32 %v1110, %v1268
        %v1270 = vpop.f32.mrb[0].mxu0
        %1271 = vmatprep.mubr.bf16.mxu0 0
        %1272 = vmatmul.mubr.bf16.gmra.mrb[0].mxu0 %v1197
        %v1273 = vpop.f32.mrb[0].mxu0
        %v1274 = vadd.f32 %v1115, %v1273
        %v1275 = vpop.f32.mrb[0].mxu0
        %v1276 = vpop.f32.mrb[0].mxu0
        %v1277 = vadd.f32 %v1118, %v1276
        %v1278 = vpop.f32.mrb[0].mxu0
        %1279 = vmatprep.mubr.bf16.mxu0 0
        %1280 = vmatmul.mubr.bf16.gmra.mrb[0].mxu0 %v1199
        %v1281 = vpop.f32.mrb[0].mxu0
        %v1282 = vadd.f32 %v1123, %v1281
        %v1283 = vpop.f32.mrb[0].mxu0
        %v1284 = vpop.f32.mrb[0].mxu0
        %v1285 = vadd.f32 %v1126, %v1284
        %v1286 = vpop.f32.mrb[0].mxu0
        %1287 = vmatprep.mubr.bf16.mxu0 0
        %1288 = vmatmul.mubr.bf16.gmra.mrb[0].mxu0 %v1201
        %v1289 = vpop.f32.mrb[0].mxu0
        %v1290 = vadd.f32 %v1131, %v1289
        %v1291 = vpop.f32.mrb[0].mxu0
        %v1292 = vpop.f32.mrb[0].mxu0
        %v1293 = vadd.f32 %v1134, %v1292
        %v1294 = vpop.f32.mrb[0].mxu0
        %1295 = vmatprep.mubr.bf16.mxu0 0
        %1296 = vmatmul.mubr.bf16.gmra.mrb[0].mxu0 %v1203
        %v1297 = vpop.f32.mrb[0].mxu0
        %v1298 = vadd.f32 %v1139, %v1297
        %v1299 = vpop.f32.mrb[0].mxu0
        %v1300 = vpop.f32.mrb[0].mxu0
        %v1301 = vadd.f32 %v1142, %v1300
        %v1302 = vpop.f32.mrb[0].mxu0
        %1303 = vmatprep.mubr.bf16.mxu0 0
        %1304 = vmatmul.mubr.bf16.gmra.mrb[0].mxu0 %v1205
        %v1305 = vpop.f32.mrb[0].mxu0
        %v1306 = vadd.f32 %v1147, %v1305
        %v1307 = vpop.f32.mrb[0].mxu0
        %v1308 = vpop.f32.mrb[0].mxu0
        %v1309 = vadd.f32 %v1150, %v1308
        %v1310 = vpop.f32.mrb[0].mxu0
        %1311 = vdwg.mxu0
        %v1312 = vld [vmem:[#allocation2 + $0x10] sm:$0xc]
        %v1313 = vld [vmem:[#allocation2 + $0x14] sm:$0xf]
        %v1314 = vld [vmem:[#allocation2 + $0x18] sm:$0xf]
        %v1315 = vld [vmem:[#allocation2 + $0x1c] sm:$0xf]
        %v1316 = vld [vmem:[#allocation2 + $0x20] sm:$0xf]
        %v1317 = vld [vmem:[#allocation2 + $0x24] sm:$0xf]
        %v1318 = vld [vmem:[#allocation2 + $0x28] sm:$0xf]
        %v1319 = vld [vmem:[#allocation2 + $0x2c] sm:$0xf]
        %v1320 = vld [vmem:[#allocation2 + $0x30] sm:$0xf]
        %v1321 = vld [vmem:[#allocation2 + $0x34] sm:$0xf]
        %v1322 = vld [vmem:[#allocation2 + $0x38] sm:$0xf]
        %v1323 = vld [vmem:[#allocation2 + $0x3c] sm:$0xf]
        %v1324 = vld [vmem:[#allocation2 + $0x40] sm:$0xf]
        %v1325 = vld [vmem:[#allocation2 + $0x44] sm:$0xf]
        %v1326 = vld [vmem:[#allocation2 + $0x48] sm:$0xf]
        %v1327 = vld [vmem:[#allocation2 + $0x4c] sm:$0xf]
        %v1328 = vld [vmem:[#allocation2 + $0x50] sm:$0xf]
        %v1329 = vld [vmem:[#allocation2 + $0x54] sm:$0xf]
        %v1330 = vld [vmem:[#allocation2 + $0x58] sm:$0x3]
        %v1331 = vld [vmem:[#allocation2 + $0x58] sm:$0x7]
        %v1332 = vld [vmem:[#allocation2 + $0x10] sm:$0x8]
        %v1352 = vunpack.c.l.b16 %v1312
        %v1353 = vunpack.c.l.b16 %v1313
        %v1354 = vunpack.c.l.b16 %v1314
        %v1355 = vunpack.c.l.b16 %v1315
        %v1356 = vunpack.c.l.b16 %v1316
        %v1357 = vunpack.c.l.b16 %v1317
        %v1358 = vunpack.c.l.b16 %v1318
        %v1359 = vunpack.c.l.b16 %v1319
        %v1360 = vunpack.c.l.b16 %v1320
        %v1361 = vunpack.c.l.b16 %v1321
        %v1362 = vunpack.c.l.b16 %v1322
        %v1363 = vunpack.c.l.b16 %v1323
        %v1364 = vunpack.c.l.b16 %v1324
        %v1365 = vunpack.c.l.b16 %v1325
        %v1366 = vunpack.c.l.b16 %v1326
        %v1367 = vunpack.c.l.b16 %v1327
        %v1368 = vunpack.c.l.b16 %v1328
        %v1369 = vunpack.c.l.b16 %v1329
        %v1370 = vunpack.c.l.b16 %v1330
        %v1371 = vpack.c.b16 %v1353, %v1352
        %v1372 = vpack.c.b16 %v1355, %v1354
        %v1373 = vpack.c.b16 %v1357, %v1356
        %v1374 = vpack.c.b16 %v1359, %v1358
        %v1375 = vpack.c.b16 %v1361, %v1360
        %v1376 = vpack.c.b16 %v1363, %v1362
        %v1377 = vpack.c.b16 %v1365, %v1364
        %v1378 = vpack.c.b16 %v1367, %v1366
        %v1379 = vpack.c.b16 %v1369, %v1368
        %v1380 = vpack.c.b16 %v1370, %v1370
        %v1382 = vunpack.c.l.b16 %v1331
        %v1383 = vpack.c.b16 %v1382, %v1382
        %v1385 = vshrl.u32 %v1371, 16
        %v1387 = vshll.u32 %v1371, 16
        %v1389 = vrot.slane %v1387, 1
        %v1390 = vor.u32 %v1385, %v1389
        %v1392 = vshll.u32 %v1372, 16
        %v1394 = vrot.slane %v1392, 1
        %v1395 = vsel %vm670, %v1390, %v1394
        %v1396 = vshrl.u32 %v1372, 16
        %v1398 = vor.u32 %v1396, %v1394
        %v1400 = vshll.u32 %v1373, 16
        %v1402 = vrot.slane %v1400, 1
        %v1403 = vsel %vm670, %v1398, %v1402
        %v1404 = vshrl.u32 %v1373, 16
        %v1406 = vor.u32 %v1404, %v1402
        %v1408 = vshll.u32 %v1374, 16
        %v1410 = vrot.slane %v1408, 1
        %v1411 = vsel %vm670, %v1406, %v1410
        %v1412 = vshrl.u32 %v1374, 16
        %v1414 = vor.u32 %v1412, %v1410
        %v1416 = vshll.u32 %v1375, 16
        %v1418 = vrot.slane %v1416, 1
        %v1419 = vsel %vm670, %v1414, %v1418
        %v1420 = vshrl.u32 %v1375, 16
        %v1422 = vor.u32 %v1420, %v1418
        %v1424 = vshll.u32 %v1376, 16
        %v1426 = vrot.slane %v1424, 1
        %v1427 = vsel %vm670, %v1422, %v1426
        %v1428 = vshrl.u32 %v1376, 16
        %v1430 = vor.u32 %v1428, %v1426
        %v1432 = vshll.u32 %v1377, 16
        %v1434 = vrot.slane %v1432, 1
        %v1435 = vsel %vm670, %v1430, %v1434
        %v1436 = vshrl.u32 %v1377, 16
        %v1438 = vor.u32 %v1436, %v1434
        %v1440 = vshll.u32 %v1378, 16
        %v1442 = vrot.slane %v1440, 1
        %v1443 = vsel %vm670, %v1438, %v1442
        %v1444 = vshrl.u32 %v1378, 16
        %v1446 = vor.u32 %v1444, %v1442
        %v1448 = vshll.u32 %v1379, 16
        %v1450 = vrot.slane %v1448, 1
        %v1451 = vsel %vm670, %v1446, %v1450
        %v1452 = vshrl.u32 %v1379, 16
        %v1454 = vor.u32 %v1452, %v1450
        %v1456 = vshll.u32 %v1383, 16
        %v1458 = vrot.slane %v1456, 1
        %v1459 = vsel %vm670, %v1454, %v1458
        %v1460 = vshrl.u32 %v1383, 16
        %v1462 = vor.u32 %v1460, %v1458
        %1463 = vrot.lane.b32.xlu0 %v1395, 32
        %v1464 = vpop.permute.xlu0 %1463
        %1465 = vrot.lane.b32.xlu0 %v1403, 32
        %v1466 = vpop.permute.xlu0 %1465
        %1467 = vrot.lane.b32.xlu0 %v1411, 32
        %v1468 = vpop.permute.xlu0 %1467
        %1469 = vrot.lane.b32.xlu0 %v1419, 32
        %v1470 = vpop.permute.xlu0 %1469
        %1471 = vrot.lane.b32.xlu0 %v1427, 32
        %v1472 = vpop.permute.xlu0 %1471
        %1473 = vrot.lane.b32.xlu0 %v1435, 32
        %v1474 = vpop.permute.xlu0 %1473
        %1475 = vrot.lane.b32.xlu0 %v1443, 32
        %v1476 = vpop.permute.xlu0 %1475
        %1477 = vrot.lane.b32.xlu0 %v1451, 32
        %v1478 = vpop.permute.xlu0 %1477
        %1479 = vrot.lane.b32.xlu0 %v1459, 32
        %v1480 = vpop.permute.xlu0 %1479
        %1481 = vrot.lane.b32.xlu0 %v1462, 32
        %v1482 = vpop.permute.xlu0 %1481
        %v1484 = vunpack.c.l.b16 %v1332
        %v1485 = vpack.c.b16 %v1353, %v1484
        %v1486 = vrot.slane %v1485, 1
        %v1487 = vrot.slane %v1372, 1
        %v1488 = vsel %vm768, %v1486, %v1487
        %v1489 = vrot.slane %v1373, 1
        %v1490 = vsel %vm768, %v1487, %v1489
        %v1491 = vrot.slane %v1374, 1
        %v1492 = vsel %vm768, %v1489, %v1491
        %v1493 = vrot.slane %v1375, 1
        %v1494 = vsel %vm768, %v1491, %v1493
        %v1495 = vrot.slane %v1376, 1
        %v1496 = vsel %vm768, %v1493, %v1495
        %v1497 = vrot.slane %v1377, 1
        %v1498 = vsel %vm768, %v1495, %v1497
        %v1499 = vrot.slane %v1378, 1
        %v1500 = vsel %vm768, %v1497, %v1499
        %v1501 = vrot.slane %v1379, 1
        %v1502 = vsel %vm768, %v1499, %v1501
        %v1503 = vrot.slane %v1383, 1
        %v1504 = vsel %vm768, %v1501, %v1503
        %1505 = vrot.lane.b32.xlu0 %v1488, 64
        %v1506 = vpop.permute.xlu0 %1505
        %1507 = vrot.lane.b32.xlu0 %v1490, 64
        %v1508 = vpop.permute.xlu0 %1507
        %1509 = vrot.lane.b32.xlu0 %v1492, 64
        %v1510 = vpop.permute.xlu0 %1509
        %1511 = vrot.lane.b32.xlu0 %v1494, 64
        %v1512 = vpop.permute.xlu0 %1511
        %1513 = vrot.lane.b32.xlu0 %v1496, 64
        %v1514 = vpop.permute.xlu0 %1513
        %1515 = vrot.lane.b32.xlu0 %v1498, 64
        %v1516 = vpop.permute.xlu0 %1515
        %1517 = vrot.lane.b32.xlu0 %v1500, 64
        %v1518 = vpop.permute.xlu0 %1517
        %1519 = vrot.lane.b32.xlu0 %v1502, 64
        %v1520 = vpop.permute.xlu0 %1519
        %1521 = vrot.lane.b32.xlu0 %v1504, 64
        %v1522 = vpop.permute.xlu0 %1521
        %1523 = vrot.lane.b32.xlu0 %v1503, 64
        %v1524 = vpop.permute.xlu0 %1523
        %v1526 = vsel %vm806, %v1371, %v1464
        %v1528 = vsel %vm806, %v1372, %v1466
        %v1530 = vsel %vm806, %v1373, %v1468
        %v1532 = vsel %vm806, %v1374, %v1470
        %v1534 = vsel %vm806, %v1375, %v1472
        %v1536 = vsel %vm806, %v1376, %v1474
        %v1538 = vsel %vm806, %v1377, %v1476
        %v1540 = vsel %vm806, %v1378, %v1478
        %v1542 = vsel %vm806, %v1379, %v1480
        %v1545 = vsel %vm806, %v1380, %v1482
        %v1547 = vsel %vm825, %v1526, %v1506
        %v1549 = vsel %vm825, %v1528, %v1508
        %v1551 = vsel %vm825, %v1530, %v1510
        %v1553 = vsel %vm825, %v1532, %v1512
        %v1555 = vsel %vm825, %v1534, %v1514
        %v1557 = vsel %vm825, %v1536, %v1516
        %v1559 = vsel %vm825, %v1538, %v1518
        %v1561 = vsel %vm825, %v1540, %v1520
        %v1563 = vsel %vm825, %v1542, %v1522
        %v1565 = vsel %vm825, %v1545, %v1524
        %s1566 = scalar_lea.vmem %s1, 96
        %v1567 = vld [vmem:[%s1566] sm:$0xf]
        %v1568 = vld [vmem:[%s1566 + $0x4] sm:$0xf]
        %v1569 = vld [vmem:[%s1566 + $0x8] sm:$0xf]
        %v1570 = vld [vmem:[%s1566 + $0xc] sm:$0xf]
        %v1571 = vld [vmem:[%s1566 + $0x10] sm:$0xf]
        %v1572 = vld [vmem:[%s1566 + $0x14] sm:$0xf]
        %v1573 = vld [vmem:[%s1566 + $0x18] sm:$0xf]
        %v1574 = vld [vmem:[%s1566 + $0x1c] sm:$0xf]
        %v1575 = vld [vmem:[%s1566 + $0x20] sm:$0xf]
        %v1576 = vld [vmem:[%s1566 + $0x24] sm:$0xf]
        %v1577 = vld [vmem:[%s1566 + $0x28] sm:$0xf]
        %v1578 = vld [vmem:[%s1566 + $0x2c] sm:$0xf]
        %vm1589 = vcmask 1045504
        %v1590 = vrot.slane %v1547, 2
        %v1591 = vrot.slane %v1549, 2
        %v1592 = vsel %vm1589, %v1590, %v1591
        %v1593 = vrot.slane %v1551, 2
        %v1594 = vsel %vm1589, %v1591, %v1593
        %v1595 = vrot.slane %v1553, 2
        %v1596 = vsel %vm1589, %v1593, %v1595
        %v1597 = vrot.slane %v1555, 2
        %v1598 = vsel %vm1589, %v1595, %v1597
        %v1599 = vrot.slane %v1557, 2
        %v1600 = vsel %vm1589, %v1597, %v1599
        %v1601 = vrot.slane %v1559, 2
        %v1602 = vsel %vm1589, %v1599, %v1601
        %v1603 = vrot.slane %v1561, 2
        %v1604 = vsel %vm1589, %v1601, %v1603
        %v1605 = vrot.slane %v1563, 2
        %v1606 = vsel %vm1589, %v1603, %v1605
        %v1607 = vrot.slane %v1565, 2
        %v1608 = vsel %vm1589, %v1605, %v1607
        %v1621 = vunpack.c.l.b16 %v1567
        %v1622 = vunpack.c.l.b16 %v1568
        %v1623 = vunpack.c.l.b16 %v1569
        %v1624 = vunpack.c.l.b16 %v1570
        %v1625 = vunpack.c.l.b16 %v1571
        %v1626 = vunpack.c.l.b16 %v1572
        %v1627 = vunpack.c.l.b16 %v1573
        %v1628 = vunpack.c.l.b16 %v1574
        %v1629 = vunpack.c.l.b16 %v1575
        %v1630 = vunpack.c.l.b16 %v1576
        %v1631 = vunpack.c.l.b16 %v1577
        %v1632 = vunpack.c.l.b16 %v1578
        %v1633 = vpack.c.b16 %v1622, %v1621
        %v1634 = vpack.c.b16 %v1624, %v1623
        %v1635 = vpack.c.b16 %v1626, %v1625
        %v1636 = vpack.c.b16 %v1628, %v1627
        %v1637 = vpack.c.b16 %v1630, %v1629
        %v1638 = vpack.c.b16 %v1632, %v1631
        %v1646 = vsel %vm1020, %v1592, 0
        %v1649 = vsel %vm1020, %v1594, 0
        %v1652 = vsel %vm1020, %v1596, 0
        %v1655 = vsel %vm1020, %v1598, 0
        %v1658 = vsel %vm1020, %v1600, 0
        %v1661 = vsel %vm1020, %v1602, 0
        %v1664 = vsel %vm1020, %v1604, 0
        %v1667 = vsel %vm1020, %v1606, 0
        %v1670 = vsel %vm1020, %v1608, 0
        %1672 = vmatprep.subr.bf16.mxu0 0
        %1673 = vmatpush1.bf16.msra.mxu0 %v1633
        %1674 = vmatprep.subr.bf16.mxu0 0
        %1675 = vmatpush1.bf16.msra.mxu0 %v1634
        %1676 = vmatprep.subr.bf16.mxu0 0
        %1677 = vmatpush1.bf16.msra.mxu0 %v1635
        %1678 = vmatprep.subr.bf16.mxu0 0
        %1679 = vmatpush1.bf16.msra.mxu0 %v1636
        %1680 = vmatprep.subr.bf16.mxu0 0
        %1681 = vmatpush1.bf16.msra.mxu0 %v1637
        %1682 = vmatprep.subr.bf16.mxu0 0
        %1683 = vmatpush1.bf16.msra.mxu0 %v1638
        %1684 = vmatprep.subr.bf16.mxu0 0
        %1685 = vmatpush1.bf16.msra.mxu0 0
        %1686 = vmatprep.subr.bf16.mxu0 0
        %1687 = vmatpush1.bf16.msra.mxu0 0
        %1688 = vmatprep.subr.bf16.mxu0 0
        %1689 = vmatpush1.bf16.msra.mxu0 0
        %1690 = vmatprep.subr.bf16.mxu0 0
        %1691 = vmatpush1.bf16.msra.mxu0 0
        %1692 = vmatprep.subr.bf16.mxu0 0
        %1693 = vmatpush1.bf16.msra.mxu0 0
        %1694 = vmatprep.subr.bf16.mxu0 0
        %1695 = vmatpush1.bf16.msra.mxu0 0
        %1696 = vmatprep.subr.bf16.mxu0 0
        %1697 = vmatpush1.bf16.msra.mxu0 0
        %1698 = vmatprep.subr.bf16.mxu0 0
        %1699 = vmatpush1.bf16.msra.mxu0 0
        %1700 = vmatprep.subr.bf16.mxu0 0
        %1701 = vmatpush1.bf16.msra.mxu0 0
        %1702 = vmatprep.subr.bf16.mxu0 0
        %1703 = vmatpush1.bf16.msra.mxu0 0
        %1704 = vmatprep.mubr.bf16.mxu0 0
        %1705 = vmatmul.mubr.bf16.gmra.mrb[0].mxu0 %v1646
        %v1706 = vpop.f32.mrb[0].mxu0
        %v1707 = vadd.f32 0.0, %v1706
        %v1708 = vpop.f32.mrb[0].mxu0
        %v1709 = vpop.f32.mrb[0].mxu0
        %v1710 = vadd.f32 0.0, %v1709
        %v1711 = vpop.f32.mrb[0].mxu0
        %1712 = vmatprep.mubr.bf16.mxu0 0
        %1713 = vmatmul.mubr.bf16.gmra.mrb[0].mxu0 %v1649
        %v1714 = vpop.f32.mrb[0].mxu0
        %v1715 = vadd.f32 0.0, %v1714
        %v1716 = vpop.f32.mrb[0].mxu0
        %v1717 = vpop.f32.mrb[0].mxu0
        %v1718 = vadd.f32 0.0, %v1717
        %v1719 = vpop.f32.mrb[0].mxu0
        %1720 = vmatprep.mubr.bf16.mxu0 0
        %1721 = vmatmul.mubr.bf16.gmra.mrb[0].mxu0 %v1652
        %v1722 = vpop.f32.mrb[0].mxu0
        %v1723 = vadd.f32 0.0, %v1722
        %v1724 = vpop.f32.mrb[0].mxu0
        %v1725 = vpop.f32.mrb[0].mxu0
        %v1726 = vadd.f32 0.0, %v1725
        %v1727 = vpop.f32.mrb[0].mxu0
        %1728 = vmatprep.mubr.bf16.mxu0 0
        %1729 = vmatmul.mubr.bf16.gmra.mrb[0].mxu0 %v1655
        %v1730 = vpop.f32.mrb[0].mxu0
        %v1731 = vadd.f32 0.0, %v1730
        %v1732 = vpop.f32.mrb[0].mxu0
        %v1733 = vpop.f32.mrb[0].mxu0
        %v1734 = vadd.f32 0.0, %v1733
        %v1735 = vpop.f32.mrb[0].mxu0
        %1736 = vmatprep.mubr.bf16.mxu0 0
        %1737 = vmatmul.mubr.bf16.gmra.mrb[0].mxu0 %v1658
        %v1738 = vpop.f32.mrb[0].mxu0
        %v1739 = vadd.f32 0.0, %v1738
        %v1740 = vpop.f32.mrb[0].mxu0
        %v1741 = vpop.f32.mrb[0].mxu0
        %v1742 = vadd.f32 0.0, %v1741
        %v1743 = vpop.f32.mrb[0].mxu0
        %1744 = vmatprep.mubr.bf16.mxu0 0
        %1745 = vmatmul.mubr.bf16.gmra.mrb[0].mxu0 %v1661
        %v1746 = vpop.f32.mrb[0].mxu0
        %v1747 = vadd.f32 0.0, %v1746
        %v1748 = vpop.f32.mrb[0].mxu0
        %v1749 = vpop.f32.mrb[0].mxu0
        %v1750 = vadd.f32 0.0, %v1749
        %v1751 = vpop.f32.mrb[0].mxu0
        %1752 = vmatprep.mubr.bf16.mxu0 0
        %1753 = vmatmul.mubr.bf16.gmra.mrb[0].mxu0 %v1664
        %v1754 = vpop.f32.mrb[0].mxu0
        %v1755 = vadd.f32 0.0, %v1754
        %v1756 = vpop.f32.mrb[0].mxu0
        %v1757 = vpop.f32.mrb[0].mxu0
        %v1758 = vadd.f32 0.0, %v1757
        %v1759 = vpop.f32.mrb[0].mxu0
        %1760 = vmatprep.mubr.bf16.mxu0 0
        %1761 = vmatmul.mubr.bf16.gmra.mrb[0].mxu0 %v1667
        %v1762 = vpop.f32.mrb[0].mxu0
        %v1763 = vadd.f32 0.0, %v1762
        %v1764 = vpop.f32.mrb[0].mxu0
        %v1765 = vpop.f32.mrb[0].mxu0
        %v1766 = vadd.f32 0.0, %v1765
        %v1767 = vpop.f32.mrb[0].mxu0
        %1768 = vmatprep.mubr.bf16.mxu0 0
        %1769 = vmatmul.mubr.bf16.gmra.mrb[0].mxu0 %v1670
        %v1770 = vpop.f32.mrb[0].mxu0
        %v1771 = vadd.f32 0.0, %v1770
        %v1772 = vpop.f32.mrb[0].mxu0
        %v1773 = vpop.f32.mrb[0].mxu0
        %v1774 = vadd.f32 0.0, %v1773
        %v1775 = vpop.f32.mrb[0].mxu0
        %1776 = vdwg.mxu0
        %v1777 = vadd.f32 %v1242, %v1707
        %v1778 = vadd.f32 %v1245, %v1710
        %v1779 = vadd.f32 %v1250, %v1715
        %v1780 = vadd.f32 %v1253, %v1718
        %v1781 = vadd.f32 %v1258, %v1723
        %v1782 = vadd.f32 %v1261, %v1726
        %v1783 = vadd.f32 %v1266, %v1731
        %v1784 = vadd.f32 %v1269, %v1734
        %v1785 = vadd.f32 %v1274, %v1739
        %v1786 = vadd.f32 %v1277, %v1742
        %v1787 = vadd.f32 %v1282, %v1747
        %v1788 = vadd.f32 %v1285, %v1750
        %v1789 = vadd.f32 %v1290, %v1755
        %v1790 = vadd.f32 %v1293, %v1758
        %v1791 = vadd.f32 %v1298, %v1763
        %v1792 = vadd.f32 %v1301, %v1766
        %v1793 = vadd.f32 %v1306, %v1771
        %v1794 = vadd.f32 %v1309, %v1774
        %v1795 = vld [vmem:[%s2] sm:$0x1]
        %v1797 = vlaneseq
        %v1798 = vshrl.u32 %v1797, 7
        %v1799 = vsub.s32 0, %v1798
        %v1800 = vrot.slane %v1795, %v1799
        %v1802 = vadd.f32 %v1777, %v1800
        %v1803 = vadd.f32 %v1778, %v1800
        %v1804 = vadd.f32 %v1779, %v1800
        %v1805 = vadd.f32 %v1780, %v1800
        %v1806 = vadd.f32 %v1781, %v1800
        %v1807 = vadd.f32 %v1782, %v1800
        %v1808 = vadd.f32 %v1783, %v1800
        %v1809 = vadd.f32 %v1784, %v1800
        %v1810 = vadd.f32 %v1785, %v1800
        %v1811 = vadd.f32 %v1786, %v1800
        %v1812 = vadd.f32 %v1787, %v1800
        %v1813 = vadd.f32 %v1788, %v1800
        %v1814 = vadd.f32 %v1789, %v1800
        %v1815 = vadd.f32 %v1790, %v1800
        %v1816 = vadd.f32 %v1791, %v1800
        %v1817 = vadd.f32 %v1792, %v1800
        %v1818 = vadd.f32 %v1793, %v1800
        %v1819 = vadd.f32 %v1794, %v1800
        %v1820 = vmax.f32 %v1802, 0.0
        %v1821 = vmax.f32 %v1803, 0.0
        %v1822 = vmax.f32 %v1804, 0.0
        %v1823 = vmax.f32 %v1805, 0.0
        %v1824 = vmax.f32 %v1806, 0.0
        %v1825 = vmax.f32 %v1807, 0.0
        %v1826 = vmax.f32 %v1808, 0.0
        %v1827 = vmax.f32 %v1809, 0.0
        %v1828 = vmax.f32 %v1810, 0.0
        %v1829 = vmax.f32 %v1811, 0.0
        %v1830 = vmax.f32 %v1812, 0.0
        %v1831 = vmax.f32 %v1813, 0.0
        %v1832 = vmax.f32 %v1814, 0.0
        %v1833 = vmax.f32 %v1815, 0.0
        %v1834 = vmax.f32 %v1816, 0.0
        %v1835 = vmax.f32 %v1817, 0.0
        %v1836 = vmax.f32 %v1818, 0.0
        %v1837 = vmax.f32 %v1819, 0.0
        %v1856 = vcombine.high %v1820, %v1820
        %v1858 = vunpack.c.l.s4 1983009808
        %v1859 = vunpack.c.0.s8 %v1858
        %v1860 = vlaneseq
        %v1861 = vshrl.u32 %v1860, 7
        %v1862 = vsub.s32 %v1859, %v1861
        %v1863 = vrot.slane %v1820, %v1862
        %v1865 = vunpack.c.l.s4 1983009808
        %v1866 = vunpack.c.0.s8 %v1865
        %v1867 = vlaneseq
        %v1868 = vshrl.u32 %v1867, 7
        %v1869 = vsub.s32 %v1866, %v1868
        %v1870 = vrot.slane %v1856, %v1869
        %v1871 = vcombine.high %v1863, %v1863
        %v1872 = vcombine.high %v1870, %v1870
        %v1873 = vcombine.high %v1821, %v1821
        %v1875 = vunpack.c.l.s4 1983009808
        %v1876 = vunpack.c.0.s8 %v1875
        %v1877 = vlaneseq
        %v1878 = vshrl.u32 %v1877, 7
        %v1879 = vsub.s32 %v1876, %v1878
        %v1880 = vrot.slane %v1821, %v1879
        %v1882 = vunpack.c.l.s4 1983009808
        %v1883 = vunpack.c.0.s8 %v1882
        %v1884 = vlaneseq
        %v1885 = vshrl.u32 %v1884, 7
        %v1886 = vsub.s32 %v1883, %v1885
        %v1887 = vrot.slane %v1873, %v1886
        %v1888 = vcombine.high %v1880, %v1880
        %v1889 = vcombine.high %v1887, %v1887
        %v1890 = vcombine.high %v1822, %v1822
        %v1892 = vunpack.c.l.s4 1983009808
        %v1893 = vunpack.c.0.s8 %v1892
        %v1894 = vlaneseq
        %v1895 = vshrl.u32 %v1894, 7
        %v1896 = vsub.s32 %v1893, %v1895
        %v1897 = vrot.slane %v1822, %v1896
        %v1899 = vunpack.c.l.s4 1983009808
        %v1900 = vunpack.c.0.s8 %v1899
        %v1901 = vlaneseq
        %v1902 = vshrl.u32 %v1901, 7
        %v1903 = vsub.s32 %v1900, %v1902
        %v1904 = vrot.slane %v1890, %v1903
        %v1905 = vcombine.high %v1897, %v1897
        %v1906 = vcombine.high %v1904, %v1904
        %v1907 = vcombine.high %v1823, %v1823
        %v1909 = vunpack.c.l.s4 1983009808
        %v1910 = vunpack.c.0.s8 %v1909
        %v1911 = vlaneseq
        %v1912 = vshrl.u32 %v1911, 7
        %v1913 = vsub.s32 %v1910, %v1912
        %v1914 = vrot.slane %v1823, %v1913
        %v1916 = vunpack.c.l.s4 1983009808
        %v1917 = vunpack.c.0.s8 %v1916
        %v1918 = vlaneseq
        %v1919 = vshrl.u32 %v1918, 7
        %v1920 = vsub.s32 %v1917, %v1919
        %v1921 = vrot.slane %v1907, %v1920
        %v1922 = vcombine.high %v1914, %v1914
        %v1923 = vcombine.high %v1921, %v1921
        %v1924 = vcombine.high %v1824, %v1824
        %v1926 = vunpack.c.l.s4 1983009808
        %v1927 = vunpack.c.0.s8 %v1926
        %v1928 = vlaneseq
        %v1929 = vshrl.u32 %v1928, 7
        %v1930 = vsub.s32 %v1927, %v1929
        %v1931 = vrot.slane %v1824, %v1930
        %v1933 = vunpack.c.l.s4 1983009808
        %v1934 = vunpack.c.0.s8 %v1933
        %v1935 = vlaneseq
        %v1936 = vshrl.u32 %v1935, 7
        %v1937 = vsub.s32 %v1934, %v1936
        %v1938 = vrot.slane %v1924, %v1937
        %v1939 = vcombine.high %v1938, %v1938
        %v1940 = vcombine.high %v1825, %v1825
        %v1942 = vunpack.c.l.s4 1983009808
        %v1943 = vunpack.c.0.s8 %v1942
        %v1944 = vlaneseq
        %v1945 = vshrl.u32 %v1944, 7
        %v1946 = vsub.s32 %v1943, %v1945
        %v1947 = vrot.slane %v1825, %v1946
        %v1949 = vunpack.c.l.s4 1983009808
        %v1950 = vunpack.c.0.s8 %v1949
        %v1951 = vlaneseq
        %v1952 = vshrl.u32 %v1951, 7
        %v1953 = vsub.s32 %v1950, %v1952
        %v1954 = vrot.slane %v1940, %v1953
        %v1955 = vcombine.high %v1947, %v1947
        %v1956 = vcombine.high %v1954, %v1954
        %v1957 = vcombine.high %v1826, %v1826
        %v1959 = vunpack.c.l.s4 1983009808
        %v1960 = vunpack.c.0.s8 %v1959
        %v1961 = vlaneseq
        %v1962 = vshrl.u32 %v1961, 7
        %v1963 = vsub.s32 %v1960, %v1962
        %v1964 = vrot.slane %v1826, %v1963
        %v1966 = vunpack.c.l.s4 1983009808
        %v1967 = vunpack.c.0.s8 %v1966
        %v1968 = vlaneseq
        %v1969 = vshrl.u32 %v1968, 7
        %v1970 = vsub.s32 %v1967, %v1969
        %v1971 = vrot.slane %v1957, %v1970
        %v1972 = vcombine.high %v1964, %v1964
        %v1973 = vcombine.high %v1971, %v1971
        %v1974 = vcombine.high %v1827, %v1827
        %v1976 = vunpack.c.l.s4 1983009808
        %v1977 = vunpack.c.0.s8 %v1976
        %v1978 = vlaneseq
        %v1979 = vshrl.u32 %v1978, 7
        %v1980 = vsub.s32 %v1977, %v1979
        %v1981 = vrot.slane %v1827, %v1980
        %v1983 = vunpack.c.l.s4 1983009808
        %v1984 = vunpack.c.0.s8 %v1983
        %v1985 = vlaneseq
        %v1986 = vshrl.u32 %v1985, 7
        %v1987 = vsub.s32 %v1984, %v1986
        %v1988 = vrot.slane %v1974, %v1987
        %v1989 = vcombine.high %v1981, %v1981
        %v1990 = vcombine.high %v1988, %v1988
        %v1991 = vcombine.high %v1828, %v1828
        %v1993 = vunpack.c.l.s4 1983009808
        %v1994 = vunpack.c.0.s8 %v1993
        %v1995 = vlaneseq
        %v1996 = vshrl.u32 %v1995, 7
        %v1997 = vsub.s32 %v1994, %v1996
        %v1998 = vrot.slane %v1828, %v1997
        %v2000 = vunpack.c.l.s4 1983009808
        %v2001 = vunpack.c.0.s8 %v2000
        %v2002 = vlaneseq
        %v2003 = vshrl.u32 %v2002, 7
        %v2004 = vsub.s32 %v2001, %v2003
        %v2005 = vrot.slane %v1991, %v2004
        %v2006 = vcombine.high %v1998, %v1998
        %v2007 = vcombine.high %v1829, %v1829
        %v2009 = vunpack.c.l.s4 1983009808
        %v2010 = vunpack.c.0.s8 %v2009
        %v2011 = vlaneseq
        %v2012 = vshrl.u32 %v2011, 7
        %v2013 = vsub.s32 %v2010, %v2012
        %v2014 = vrot.slane %v1829, %v2013
        %v2016 = vunpack.c.l.s4 1983009808
        %v2017 = vunpack.c.0.s8 %v2016
        %v2018 = vlaneseq
        %v2019 = vshrl.u32 %v2018, 7
        %v2020 = vsub.s32 %v2017, %v2019
        %v2021 = vrot.slane %v2007, %v2020
        %v2022 = vcombine.high %v2014, %v2014
        %v2023 = vcombine.high %v2021, %v2021
        %v2024 = vcombine.high %v1830, %v1830
        %v2026 = vunpack.c.l.s4 1983009808
        %v2027 = vunpack.c.0.s8 %v2026
        %v2028 = vlaneseq
        %v2029 = vshrl.u32 %v2028, 7
        %v2030 = vsub.s32 %v2027, %v2029
        %v2031 = vrot.slane %v1830, %v2030
        %v2033 = vunpack.c.l.s4 1983009808
        %v2034 = vunpack.c.0.s8 %v2033
        %v2035 = vlaneseq
        %v2036 = vshrl.u32 %v2035, 7
        %v2037 = vsub.s32 %v2034, %v2036
        %v2038 = vrot.slane %v2024, %v2037
        %v2039 = vcombine.high %v2031, %v2031
        %v2040 = vcombine.high %v2038, %v2038
        %v2041 = vcombine.high %v1831, %v1831
        %v2043 = vunpack.c.l.s4 1983009808
        %v2044 = vunpack.c.0.s8 %v2043
        %v2045 = vlaneseq
        %v2046 = vshrl.u32 %v2045, 7
        %v2047 = vsub.s32 %v2044, %v2046
        %v2048 = vrot.slane %v1831, %v2047
        %v2050 = vunpack.c.l.s4 1983009808
        %v2051 = vunpack.c.0.s8 %v2050
        %v2052 = vlaneseq
        %v2053 = vshrl.u32 %v2052, 7
        %v2054 = vsub.s32 %v2051, %v2053
        %v2055 = vrot.slane %v2041, %v2054
        %v2056 = vcombine.high %v2048, %v2048
        %v2057 = vcombine.high %v2055, %v2055
        %v2058 = vcombine.high %v1832, %v1832
        %v2060 = vunpack.c.l.s4 1983009808
        %v2061 = vunpack.c.0.s8 %v2060
        %v2062 = vlaneseq
        %v2063 = vshrl.u32 %v2062, 7
        %v2064 = vsub.s32 %v2061, %v2063
        %v2065 = vrot.slane %v1832, %v2064
        %v2067 = vunpack.c.l.s4 1983009808
        %v2068 = vunpack.c.0.s8 %v2067
        %v2069 = vlaneseq
        %v2070 = vshrl.u32 %v2069, 7
        %v2071 = vsub.s32 %v2068, %v2070
        %v2072 = vrot.slane %v2058, %v2071
        %v2073 = vcombine.high %v2065, %v2065
        %v2074 = vcombine.high %v2072, %v2072
        %v2075 = vcombine.high %v1833, %v1833
        %v2077 = vunpack.c.l.s4 1983009808
        %v2078 = vunpack.c.0.s8 %v2077
        %v2079 = vlaneseq
        %v2080 = vshrl.u32 %v2079, 7
        %v2081 = vsub.s32 %v2078, %v2080
        %v2082 = vrot.slane %v1833, %v2081
        %v2084 = vunpack.c.l.s4 1983009808
        %v2085 = vunpack.c.0.s8 %v2084
        %v2086 = vlaneseq
        %v2087 = vshrl.u32 %v2086, 7
        %v2088 = vsub.s32 %v2085, %v2087
        %v2089 = vrot.slane %v2075, %v2088
        %v2090 = vcombine.high %v2089, %v2089
        %v2091 = vcombine.high %v1834, %v1834
        %v2093 = vunpack.c.l.s4 1983009808
        %v2094 = vunpack.c.0.s8 %v2093
        %v2095 = vlaneseq
        %v2096 = vshrl.u32 %v2095, 7
        %v2097 = vsub.s32 %v2094, %v2096
        %v2098 = vrot.slane %v1834, %v2097
        %v2100 = vunpack.c.l.s4 1983009808
        %v2101 = vunpack.c.0.s8 %v2100
        %v2102 = vlaneseq
        %v2103 = vshrl.u32 %v2102, 7
        %v2104 = vsub.s32 %v2101, %v2103
        %v2105 = vrot.slane %v2091, %v2104
        %v2106 = vcombine.high %v2098, %v2098
        %v2107 = vcombine.high %v2105, %v2105
        %v2108 = vcombine.high %v1835, %v1835
        %v2110 = vunpack.c.l.s4 1983009808
        %v2111 = vunpack.c.0.s8 %v2110
        %v2112 = vlaneseq
        %v2113 = vshrl.u32 %v2112, 7
        %v2114 = vsub.s32 %v2111, %v2113
        %v2115 = vrot.slane %v1835, %v2114
        %v2117 = vunpack.c.l.s4 1983009808
        %v2118 = vunpack.c.0.s8 %v2117
        %v2119 = vlaneseq
        %v2120 = vshrl.u32 %v2119, 7
        %v2121 = vsub.s32 %v2118, %v2120
        %v2122 = vrot.slane %v2108, %v2121
        %v2123 = vcombine.high %v2115, %v2115
        %v2124 = vcombine.high %v2122, %v2122
        %v2125 = vcombine.high %v1836, %v1836
        %v2127 = vunpack.c.l.s4 1983009808
        %v2128 = vunpack.c.0.s8 %v2127
        %v2129 = vlaneseq
        %v2130 = vshrl.u32 %v2129, 7
        %v2131 = vsub.s32 %v2128, %v2130
        %v2132 = vrot.slane %v1836, %v2131
        %v2134 = vunpack.c.l.s4 1983009808
        %v2135 = vunpack.c.0.s8 %v2134
        %v2136 = vlaneseq
        %v2137 = vshrl.u32 %v2136, 7
        %v2138 = vsub.s32 %v2135, %v2137
        %v2139 = vrot.slane %v2125, %v2138
        %v2140 = vcombine.high %v2132, %v2132
        %v2141 = vcombine.high %v2139, %v2139
        %v2142 = vcombine.high %v1837, %v1837
        %v2144 = vunpack.c.l.s4 1983009808
        %v2145 = vunpack.c.0.s8 %v2144
        %v2146 = vlaneseq
        %v2147 = vshrl.u32 %v2146, 7
        %v2148 = vsub.s32 %v2145, %v2147
        %v2149 = vrot.slane %v1837, %v2148
        %v2151 = vunpack.c.l.s4 1983009808
        %v2152 = vunpack.c.0.s8 %v2151
        %v2153 = vlaneseq
        %v2154 = vshrl.u32 %v2153, 7
        %v2155 = vsub.s32 %v2152, %v2154
        %v2156 = vrot.slane %v2142, %v2155
        %v2157 = vcombine.high %v2149, %v2149
        %v2158 = vcombine.low %v1863, %v1871
        %v2159 = vcombine.low %v1870, %v1872
        %v2161 = vunpack.c.l.s4 1983009808
        %v2162 = vunpack.c.0.s8 %v2161
        %v2163 = vlaneseq
        %v2164 = vshrl.u32 %v2163, 7
        %v2165 = vsub.s32 %v2162, %v2164
        %v2166 = vrot.slane %v2158, %v2165
        %v2168 = vunpack.c.l.s4 1983009808
        %v2169 = vunpack.c.0.s8 %v2168
        %v2170 = vlaneseq
        %v2171 = vshrl.u32 %v2170, 7
        %v2172 = vsub.s32 %v2169, %v2171
        %v2173 = vrot.slane %v2159, %v2172
        %v2174 = vcombine.low %v2166, %v2173
        %v2175 = vcombine.low %v1880, %v1888
        %v2176 = vcombine.low %v1887, %v1889
        %v2178 = vunpack.c.l.s4 1983009808
        %v2179 = vunpack.c.0.s8 %v2178
        %v2180 = vlaneseq
        %v2181 = vshrl.u32 %v2180, 7
        %v2182 = vsub.s32 %v2179, %v2181
        %v2183 = vrot.slane %v2175, %v2182
        %v2185 = vunpack.c.l.s4 1983009808
        %v2186 = vunpack.c.0.s8 %v2185
        %v2187 = vlaneseq
        %v2188 = vshrl.u32 %v2187, 7
        %v2189 = vsub.s32 %v2186, %v2188
        %v2190 = vrot.slane %v2176, %v2189
        %v2191 = vcombine.low %v2183, %v2190
        %v2192 = vcombine.low %v1905, %v1904
        %v2193 = vcombine.low %v1906, %v1914
        %v2195 = vunpack.c.l.s4 1983009808
        %v2196 = vunpack.c.0.s8 %v2195
        %v2197 = vlaneseq
        %v2198 = vshrl.u32 %v2197, 7
        %v2199 = vsub.s32 %v2196, %v2198
        %v2200 = vrot.slane %v2192, %v2199
        %v2202 = vunpack.c.l.s4 1983009808
        %v2203 = vunpack.c.0.s8 %v2202
        %v2204 = vlaneseq
        %v2205 = vshrl.u32 %v2204, 7
        %v2206 = vsub.s32 %v2203, %v2205
        %v2207 = vrot.slane %v2193, %v2206
        %v2208 = vcombine.low %v2200, %v2207
        %v2209 = vcombine.low %v1922, %v1921
        %v2210 = vcombine.low %v1923, %v1931
        %v2212 = vunpack.c.l.s4 1983009808
        %v2213 = vunpack.c.0.s8 %v2212
        %v2214 = vlaneseq
        %v2215 = vshrl.u32 %v2214, 7
        %v2216 = vsub.s32 %v2213, %v2215
        %v2217 = vrot.slane %v2209, %v2216
        %v2219 = vunpack.c.l.s4 1983009808
        %v2220 = vunpack.c.0.s8 %v2219
        %v2221 = vlaneseq
        %v2222 = vshrl.u32 %v2221, 7
        %v2223 = vsub.s32 %v2220, %v2222
        %v2224 = vrot.slane %v2210, %v2223
        %v2225 = vcombine.low %v2217, %v2224
        %v2226 = vcombine.low %v1938, %v1939
        %v2227 = vcombine.low %v1947, %v1955
        %v2229 = vunpack.c.l.s4 1983009808
        %v2230 = vunpack.c.0.s8 %v2229
        %v2231 = vlaneseq
        %v2232 = vshrl.u32 %v2231, 7
        %v2233 = vsub.s32 %v2230, %v2232
        %v2234 = vrot.slane %v2226, %v2233
        %v2236 = vunpack.c.l.s4 1983009808
        %v2237 = vunpack.c.0.s8 %v2236
        %v2238 = vlaneseq
        %v2239 = vshrl.u32 %v2238, 7
        %v2240 = vsub.s32 %v2237, %v2239
        %v2241 = vrot.slane %v2227, %v2240
        %v2242 = vcombine.low %v2234, %v2241
        %v2243 = vcombine.low %v1954, %v1956
        %v2244 = vcombine.low %v1964, %v1972
        %v2246 = vunpack.c.l.s4 1983009808
        %v2247 = vunpack.c.0.s8 %v2246
        %v2248 = vlaneseq
        %v2249 = vshrl.u32 %v2248, 7
        %v2250 = vsub.s32 %v2247, %v2249
        %v2251 = vrot.slane %v2243, %v2250
        %v2253 = vunpack.c.l.s4 1983009808
        %v2254 = vunpack.c.0.s8 %v2253
        %v2255 = vlaneseq
        %v2256 = vshrl.u32 %v2255, 7
        %v2257 = vsub.s32 %v2254, %v2256
        %v2258 = vrot.slane %v2244, %v2257
        %v2259 = vcombine.low %v2251, %v2258
        %v2260 = vcombine.low %v1973, %v1981
        %v2261 = vcombine.low %v1989, %v1988
        %v2263 = vunpack.c.l.s4 1983009808
        %v2264 = vunpack.c.0.s8 %v2263
        %v2265 = vlaneseq
        %v2266 = vshrl.u32 %v2265, 7
        %v2267 = vsub.s32 %v2264, %v2266
        %v2268 = vrot.slane %v2260, %v2267
        %v2270 = vunpack.c.l.s4 1983009808
        %v2271 = vunpack.c.0.s8 %v2270
        %v2272 = vlaneseq
        %v2273 = vshrl.u32 %v2272, 7
        %v2274 = vsub.s32 %v2271, %v2273
        %v2275 = vrot.slane %v2261, %v2274
        %v2276 = vcombine.low %v2268, %v2275
        %v2277 = vcombine.low %v1990, %v1998
        %v2278 = vcombine.low %v2006, %v2005
        %v2280 = vunpack.c.l.s4 1983009808
        %v2281 = vunpack.c.0.s8 %v2280
        %v2282 = vlaneseq
        %v2283 = vshrl.u32 %v2282, 7
        %v2284 = vsub.s32 %v2281, %v2283
        %v2285 = vrot.slane %v2277, %v2284
        %v2287 = vunpack.c.l.s4 1983009808
        %v2288 = vunpack.c.0.s8 %v2287
        %v2289 = vlaneseq
        %v2290 = vshrl.u32 %v2289, 7
        %v2291 = vsub.s32 %v2288, %v2290
        %v2292 = vrot.slane %v2278, %v2291
        %v2293 = vcombine.low %v2285, %v2292
        %v2294 = vcombine.low %v2014, %v2022
        %v2295 = vcombine.low %v2021, %v2023
        %v2297 = vunpack.c.l.s4 1983009808
        %v2298 = vunpack.c.0.s8 %v2297
        %v2299 = vlaneseq
        %v2300 = vshrl.u32 %v2299, 7
        %v2301 = vsub.s32 %v2298, %v2300
        %v2302 = vrot.slane %v2294, %v2301
        %v2304 = vunpack.c.l.s4 1983009808
        %v2305 = vunpack.c.0.s8 %v2304
        %v2306 = vlaneseq
        %v2307 = vshrl.u32 %v2306, 7
        %v2308 = vsub.s32 %v2305, %v2307
        %v2309 = vrot.slane %v2295, %v2308
        %v2310 = vcombine.low %v2302, %v2309
        %v2311 = vcombine.low %v2031, %v2039
        %v2312 = vcombine.low %v2038, %v2040
        %v2314 = vunpack.c.l.s4 1983009808
        %v2315 = vunpack.c.0.s8 %v2314
        %v2316 = vlaneseq
        %v2317 = vshrl.u32 %v2316, 7
        %v2318 = vsub.s32 %v2315, %v2317
        %v2319 = vrot.slane %v2311, %v2318
        %v2321 = vunpack.c.l.s4 1983009808
        %v2322 = vunpack.c.0.s8 %v2321
        %v2323 = vlaneseq
        %v2324 = vshrl.u32 %v2323, 7
        %v2325 = vsub.s32 %v2322, %v2324
        %v2326 = vrot.slane %v2312, %v2325
        %v2327 = vcombine.low %v2319, %v2326
        %v2328 = vcombine.low %v2056, %v2055
        %v2329 = vcombine.low %v2057, %v2065
        %v2331 = vunpack.c.l.s4 1983009808
        %v2332 = vunpack.c.0.s8 %v2331
        %v2333 = vlaneseq
        %v2334 = vshrl.u32 %v2333, 7
        %v2335 = vsub.s32 %v2332, %v2334
        %v2336 = vrot.slane %v2328, %v2335
        %v2338 = vunpack.c.l.s4 1983009808
        %v2339 = vunpack.c.0.s8 %v2338
        %v2340 = vlaneseq
        %v2341 = vshrl.u32 %v2340, 7
        %v2342 = vsub.s32 %v2339, %v2341
        %v2343 = vrot.slane %v2329, %v2342
        %v2344 = vcombine.low %v2336, %v2343
        %v2345 = vcombine.low %v2073, %v2072
        %v2346 = vcombine.low %v2074, %v2082
        %v2348 = vunpack.c.l.s4 1983009808
        %v2349 = vunpack.c.0.s8 %v2348
        %v2350 = vlaneseq
        %v2351 = vshrl.u32 %v2350, 7
        %v2352 = vsub.s32 %v2349, %v2351
        %v2353 = vrot.slane %v2345, %v2352
        %v2355 = vunpack.c.l.s4 1983009808
        %v2356 = vunpack.c.0.s8 %v2355
        %v2357 = vlaneseq
        %v2358 = vshrl.u32 %v2357, 7
        %v2359 = vsub.s32 %v2356, %v2358
        %v2360 = vrot.slane %v2346, %v2359
        %v2361 = vcombine.low %v2353, %v2360
        %v2362 = vcombine.low %v2089, %v2090
        %v2363 = vcombine.low %v2098, %v2106
        %v2365 = vunpack.c.l.s4 1983009808
        %v2366 = vunpack.c.0.s8 %v2365
        %v2367 = vlaneseq
        %v2368 = vshrl.u32 %v2367, 7
        %v2369 = vsub.s32 %v2366, %v2368
        %v2370 = vrot.slane %v2362, %v2369
        %v2372 = vunpack.c.l.s4 1983009808
        %v2373 = vunpack.c.0.s8 %v2372
        %v2374 = vlaneseq
        %v2375 = vshrl.u32 %v2374, 7
        %v2376 = vsub.s32 %v2373, %v2375
        %v2377 = vrot.slane %v2363, %v2376
        %v2378 = vcombine.low %v2370, %v2377
        %v2379 = vcombine.low %v2105, %v2107
        %v2380 = vcombine.low %v2115, %v2123
        %v2382 = vunpack.c.l.s4 1983009808
        %v2383 = vunpack.c.0.s8 %v2382
        %v2384 = vlaneseq
        %v2385 = vshrl.u32 %v2384, 7
        %v2386 = vsub.s32 %v2383, %v2385
        %v2387 = vrot.slane %v2379, %v2386
        %v2389 = vunpack.c.l.s4 1983009808
        %v2390 = vunpack.c.0.s8 %v2389
        %v2391 = vlaneseq
        %v2392 = vshrl.u32 %v2391, 7
        %v2393 = vsub.s32 %v2390, %v2392
        %v2394 = vrot.slane %v2380, %v2393
        %v2395 = vcombine.low %v2387, %v2394
        %v2396 = vcombine.low %v2124, %v2132
        %v2397 = vcombine.low %v2140, %v2139
        %v2399 = vunpack.c.l.s4 1983009808
        %v2400 = vunpack.c.0.s8 %v2399
        %v2401 = vlaneseq
        %v2402 = vshrl.u32 %v2401, 7
        %v2403 = vsub.s32 %v2400, %v2402
        %v2404 = vrot.slane %v2396, %v2403
        %v2406 = vunpack.c.l.s4 1983009808
        %v2407 = vunpack.c.0.s8 %v2406
        %v2408 = vlaneseq
        %v2409 = vshrl.u32 %v2408, 7
        %v2410 = vsub.s32 %v2407, %v2409
        %v2411 = vrot.slane %v2397, %v2410
        %v2412 = vcombine.low %v2404, %v2411
        %v2413 = vcombine.low %v2141, %v2149
        %v2414 = vcombine.low %v2157, %v2156
        %v2416 = vunpack.c.l.s4 1983009808
        %v2417 = vunpack.c.0.s8 %v2416
        %v2418 = vlaneseq
        %v2419 = vshrl.u32 %v2418, 7
        %v2420 = vsub.s32 %v2417, %v2419
        %v2421 = vrot.slane %v2413, %v2420
        %v2423 = vunpack.c.l.s4 1983009808
        %v2424 = vunpack.c.0.s8 %v2423
        %v2425 = vlaneseq
        %v2426 = vshrl.u32 %v2425, 7
        %v2427 = vsub.s32 %v2424, %v2426
        %v2428 = vrot.slane %v2414, %v2427
        %v2429 = vcombine.low %v2421, %v2428
        %2446 = vst.msk [vmem:[%s177] sm:$0xff] %vm825, %v2174
        %2447 = vst.msk [vmem:[%s177 + $0x8] sm:$0xff] %vm825, %v2191
        %2448 = vst.msk [vmem:[%s177 + $0x10] sm:$0xff] %vm825, %v2208
        %2449 = vst.msk [vmem:[%s177 + $0x18] sm:$0xff] %vm825, %v2225
        %2450 = vst.msk [vmem:[%s177 + $0x20] sm:$0xff] %vm825, %v2242
        %2451 = vst.msk [vmem:[%s177 + $0x28] sm:$0xff] %vm825, %v2259
        %2452 = vst.msk [vmem:[%s177 + $0x30] sm:$0xff] %vm825, %v2276
        %2453 = vst.msk [vmem:[%s177 + $0x38] sm:$0xff] %vm825, %v2293
        %2454 = vst.msk [vmem:[%s177 + $0x40] sm:$0xff] %vm825, %v2310
        %2455 = vst.msk [vmem:[%s177 + $0x48] sm:$0xff] %vm825, %v2327
        %2456 = vst.msk [vmem:[%s177 + $0x50] sm:$0xff] %vm825, %v2344
        %2457 = vst.msk [vmem:[%s177 + $0x58] sm:$0xff] %vm825, %v2361
        %2458 = vst.msk [vmem:[%s177 + $0x60] sm:$0xff] %vm825, %v2378
        %2459 = vst.msk [vmem:[%s177 + $0x68] sm:$0xff] %vm825, %v2395
        %2460 = vst.msk [vmem:[%s177 + $0x70] sm:$0xff] %vm825, %v2412
        %2461 = vst.msk [vmem:[%s177 + $0x78] sm:$0xff] %vm825, %v2429
        %s2462 = sand.u32 %s107, 1
        %s2463 = scalar_lea.sflag [#allocation4], %s2462
        %s2464 = sand.u32 %s107, 1
        %s2465 = smul.addr %s2464, 128
        %s2466 = scalar_lea.vmem [#allocation3], %s2465
        // Predicated region
        $region41: #{tpu_custom_call.1} parent=31 // pred_check
          %p2467 = pneg %p117
        $region42: #{tpu_custom_call.1} parent=31 // pred_check_branch
          %2469 = sbr.rel (%p2467) target = $region44
        $region43: #{tpu_custom_call.1} parent=31 // pred_region
          %s2470 = smul.u32 8, %s22
          %s2472 = ssub.s32 2048, 2048
          %2473 = vsyncadd %s2463, %s2472
          %s2474 = smul.addr %s2470, 2
          %s2475 = smul.addr %s21, 32
          %s2476 = sadd.s32 %s2474, %s2475
          %s2477 = smul.addr %s2476, 128
          %s2478 = scalar_lea.hbm %s3, %s2477
          %s2479 = sshll.u32 %s2466, 4
          %s2480 = int_to_ptr.vmem [resolvable:$true] %s2479
          %2485 = dma.vmem_to_hbm [thread:$0]  %s2480, 2048, %s2478, %s2463, 128, 128, 8
        $region44: #{tpu_custom_call.1} parent=31 // pred_fallthru
          _
      $region32: #{tpu_custom_call.1} parent=5 // pred_fallthru
        _
      %p2486 = scmp.le.s32.totalorder 2, %s12
      // Predicated region
      $region45: #{tpu_custom_call.1} parent=5 // pred_check
        %p2487 = pneg %p2486
      $region46: #{tpu_custom_call.1} parent=5 // pred_check_branch
        %2489 = sbr.rel (%p2487) target = $region48
      $region47: #{tpu_custom_call.1} parent=5 // pred_region
        %s2490 = ssub.s32 %s12, 2
        // Predicated region
        $region49: #{tpu_custom_call.1} parent=47 // pred_check
          %p2491 = pneg %p123
        $region50: #{tpu_custom_call.1} parent=47 // pred_check_branch
          %2493 = sbr.rel (%p2491) target = $region52
        $region51: #{tpu_custom_call.1} parent=47 // pred_region
          %s2494 = sand.u32 %s108, 1
          %s2495 = scalar_lea.sflag [#allocation4], %s2494
          %s2496 = sand.u32 %s108, 1
          %s2497 = smul.addr %s2496, 128
          %s2498 = scalar_lea.vmem [#allocation3], %s2497
          %2499 = dma.done %s2495, 2048
        $region52: #{tpu_custom_call.1} parent=47 // pred_fallthru
          _
      $region48: #{tpu_custom_call.1} parent=5 // pred_fallthru
        _
    $region6: #{tpu_custom_call.1} parent=1 // loop_footer
      %s16 = sadd.s32 1, %s12
    $region7: #{tpu_custom_call.1} parent=1 // loop_footer_branch
      %11 = sbr.rel target = $region3
    $region8: #{tpu_custom_call.1} parent=1 // loop_exit
      _
    %2500 = vsyncpa [#allocation4], 1
    %s2501 = scalar_lea.sflag [#allocation4], 1
    %2502 = vsyncpa %s2501, 1

</llo_original>
